<compile_context>
chip_gen: v5e
topology: v5e:2x2
jax: 0.10.0
libtpu: 0.0.40
codegen_flags: <defaults>
</compile_context>

<pallas_src>
import functools
import math

import jax
import jax.numpy as jnp
from jax import lax
from jax.experimental import pallas as pl
from jax.experimental.pallas import tpu as pltpu


# ----------------------------- rotary embedding (glue) -----------------------------

def rotate_half(x):
    x1 = x[..., : x.shape[-1] // 2]
    x2 = x[..., x.shape[-1] // 2:]
    return jnp.concatenate([-x2, x1], axis=-1)


def apply_rotary_pos_emb(q, k, cos, sin):
    q_embed = q * cos + rotate_half(q) * sin
    k_embed = k * cos + rotate_half(k) * sin
    return q_embed, k_embed


# ----------------------------- tiled linear projection -----------------------------

def _matmul_kernel(x_ref, w_ref, o_ref, acc_ref):
    @pl.when(pl.program_id(2) == 0)
    def _():
        acc_ref[...] = jnp.zeros_like(acc_ref)

    acc_ref[...] += jnp.dot(x_ref[...], w_ref[...],
                            preferred_element_type=jnp.float32)

    @pl.when(pl.program_id(2) == pl.num_programs(2) - 1)
    def _():
        o_ref[...] = acc_ref[...].astype(o_ref.dtype)


def _pick_tile(dim, candidates):
    for c in candidates:
        if dim >= c and dim % c == 0:
            return c
    return dim   # small dims: use the full extent as a single block


def linear(x, w, out_dtype=jnp.bfloat16):
    """y = x @ w ; x:[M,K], w:[K,N] (nn.Linear weight pre-transposed).
    bf16 MXU inputs, f32 accumulation, tiled over (M, N, K)."""
    M, K = x.shape
    K2, N = w.shape
    assert K == K2
    tm = _pick_tile(M, (512, 256, 128))
    tn = _pick_tile(N, (1024, 512, 256, 128))
    tk = _pick_tile(K, (1024, 512, 256, 128))
    xb = x.astype(jnp.bfloat16)
    wb = w.astype(jnp.bfloat16)
    return pl.pallas_call(
        _matmul_kernel,
        out_shape=jax.ShapeDtypeStruct((M, N), out_dtype),
        grid_spec=pltpu.PrefetchScalarGridSpec(
            num_scalar_prefetch=0,
            grid=(M // tm, N // tn, K // tk),
            in_specs=[pl.BlockSpec((tm, tk), lambda i, j, k: (i, k)),
                      pl.BlockSpec((tk, tn), lambda i, j, k: (k, j))],
            out_specs=pl.BlockSpec((tm, tn), lambda i, j, k: (i, j)),
            scratch_shapes=[pltpu.VMEM((tm, tn), jnp.float32)]),
        compiler_params=pltpu.CompilerParams(
            dimension_semantics=("parallel", "parallel", "arbitrary")),
    )(xb, wb)


# ----------------------------- flash paged causal attention -----------------------------

def _flash_attn_kernel(bt_ref, sp_ref,                         # scalar prefetch (SMEM)
                       q_ref, kn_ref, vn_ref, kc_hbm, vc_hbm,  # inputs (last two: HBM)
                       o_ref,                                  # output [q_len, G*D] bf16
                       kbuf, vbuf, sem, qs_sc, m_sc, l_sc, acc_sc,   # scratch
                       *, scale, block_size, blocks_per_partition, q_len, num_groups):
    h = pl.program_id(0)                 # KV head
    seq_pos = sp_ref[0]
    bpp = blocks_per_partition
    P = bpp * block_size
    D = q_ref.shape[-1]
    NEG = jnp.float32(-1e30)

    # number of cache partitions that actually contain valid tokens
    n_parts = pl.cdiv(seq_pos, P)

    # ---- per-head init ----
    m_sc[...] = jnp.full_like(m_sc, NEG)
    l_sc[...] = jnp.zeros_like(l_sc)
    acc_sc[...] = jnp.zeros_like(acc_sc)
    qs_sc[...] = (q_ref[0].astype(jnp.float32) * scale).astype(qs_sc.dtype)
    # Zero V staging so rows of a partial partition that are never fetched are finite:
    # masked columns then contribute exactly 0 (not 0*garbage=NaN) to the PV matmul.
    vbuf[...] = jnp.zeros_like(vbuf)

    def n_blocks(part):
        return jnp.minimum(bpp, pl.cdiv(seq_pos - part * P, block_size))

    def start_fetch(part, slot):
        def body(j, carry):
            phys = bt_ref[part * bpp + j]
            dst = pl.ds(pl.multiple_of(j * block_size, block_size), block_size)
            pltpu.make_async_copy(kc_hbm.at[phys, h], kbuf.at[slot, dst, :],
                                  sem.at[0, slot]).start()
            pltpu.make_async_copy(vc_hbm.at[phys, h], vbuf.at[slot, dst, :],
                                  sem.at[1, slot]).start()
            return carry
        lax.fori_loop(0, n_blocks(part), body, 0)

    def wait_fetch(part, slot):
        # All block copies of a partition signal the same (k/v, slot) semaphore;
        # wait for each (same size per copy) with dummy descriptors.
        def body(j, carry):
            blk0 = pl.ds(0, block_size)
            pltpu.make_async_copy(kc_hbm.at[0, h], kbuf.at[slot, blk0, :],
                                  sem.at[0, slot]).wait()
            pltpu.make_async_copy(vc_hbm.at[0, h], vbuf.at[slot, blk0, :],
                                  sem.at[1, slot]).wait()
            return carry
        lax.fori_loop(0, n_blocks(part), body, 0)

    # prime partition 0
    @pl.when(n_parts > 0)
    def _():
        start_fetch(0, 0)

    # ---- data-dependent loop over valid cache partitions (double-buffered gather) ----
    @pl.loop(0, n_parts)
    def _(p):
        slot = p % 2

        @pl.when(p + 1 < n_parts)
        def _():
            start_fetch(p + 1, 1 - slot)

        wait_fetch(p, slot)

        q = qs_sc[...]                     # [GQ, D] bf16, pre-scaled
        k = kbuf[slot]                     # [P, D]  bf16
        v = vbuf[slot]
        s = lax.dot_general(q, k, (((1,), (1,)), ((), ())),
                            preferred_element_type=jnp.float32)      # [GQ, P]
        key_pos = p * P + lax.broadcasted_iota(jnp.int32, s.shape, 1)
        s = jnp.where(key_pos < seq_pos, s, NEG)
        m_prev = m_sc[...]
        m_new = jnp.maximum(m_prev, jnp.max(s, axis=-1, keepdims=True))
        alpha = jnp.exp(m_prev - m_new)
        pw = jnp.exp(s - m_new)                     # masked cols underflow to 0 exactly
        l_sc[...] = alpha * l_sc[...] + jnp.sum(pw, axis=-1, keepdims=True)
        acc_sc[...] = alpha * acc_sc[...] + jnp.dot(pw.astype(v.dtype), v,
                                                    preferred_element_type=jnp.float32)
        m_sc[...] = m_new

    # ---- fold in the new (current-chunk) K/V with the causal mask, then finalize ----
    q = qs_sc[...]
    kn = kn_ref[0]                          # [q_len, D] bf16
    vn = vn_ref[0]
    s2 = lax.dot_general(q, kn, (((1,), (1,)), ((), ())),
                         preferred_element_type=jnp.float32)         # [GQ, q_len]
    row = lax.broadcasted_iota(jnp.int32, s2.shape, 0)
    col = lax.broadcasted_iota(jnp.int32, s2.shape, 1)
    causal = col <= (row % q_len)           # query row = g*q_len + qi
    s2 = jnp.where(causal, s2, NEG)
    m_prev = m_sc[...]
    m_new = jnp.maximum(m_prev, jnp.max(s2, axis=-1, keepdims=True))
    alpha = jnp.exp(m_prev - m_new)
    pw = jnp.exp(s2 - m_new)
    l_fin = alpha * l_sc[...] + jnp.sum(pw, axis=-1, keepdims=True)
    acc_fin = alpha * acc_sc[...] + jnp.dot(pw.astype(vn.dtype), vn,
                                            preferred_element_type=jnp.float32)
    out = acc_fin * pl.reciprocal(l_fin, approx=True)   # [GQ, D] f32

    # write in the consumed [q_len, G*D] layout (lane-dense bf16 stores)
    for g in range(num_groups):
        o_ref[:, g * D:(g + 1) * D] = out[g * q_len:(g + 1) * q_len, :].astype(o_ref.dtype)


def paged_flash_causal_attn_prefill(q, k_new, v_new, k_cache, v_cache,
                                    block_tables, seq_position, *,
                                    scale, block_size, partition_len):
    """q: [KV, G*Q, D] bf16; k_new/v_new: [KV, Q, D] bf16;
       k_cache/v_cache: [num_phys_blocks, KV, block_size, D] bf16;
       block_tables: [num_logical_blocks] int32; seq_position: [1] int32.
       Returns attention output in the consumed layout [Q, KV*G*D] bf16."""
    kv, gq, d = q.shape
    q_len = k_new.shape[1]
    G = gq // q_len
    assert partition_len % block_size == 0
    bpp = partition_len // block_size

    grid_spec = pltpu.PrefetchScalarGridSpec(
        num_scalar_prefetch=2,
        grid=(kv,),
        in_specs=[
            pl.BlockSpec((1, gq, d), lambda h, bt, sp: (h, 0, 0)),
            pl.BlockSpec((1, q_len, d), lambda h, bt, sp: (h, 0, 0)),
            pl.BlockSpec((1, q_len, d), lambda h, bt, sp: (h, 0, 0)),
            pl.BlockSpec(memory_space=pl.ANY),   # k_cache stays in HBM, gathered manually
            pl.BlockSpec(memory_space=pl.ANY),   # v_cache
        ],
        out_specs=pl.BlockSpec((q_len, G * d), lambda h, bt, sp: (0, h)),
        scratch_shapes=[
            pltpu.VMEM((2, partition_len, d), jnp.bfloat16),   # K staging (double buffer)
            pltpu.VMEM((2, partition_len, d), jnp.bfloat16),   # V staging
            pltpu.SemaphoreType.DMA((2, 2)),                   # [k/v, slot] coalesced sems
            pltpu.VMEM((gq, d), jnp.bfloat16),                 # pre-scaled q
            pltpu.VMEM((gq, 1), jnp.float32),                  # running max
            pltpu.VMEM((gq, 1), jnp.float32),                  # running denom
            pltpu.VMEM((gq, d), jnp.float32),                  # running numerator
        ],
    )
    kernel = functools.partial(_flash_attn_kernel, scale=scale,
                               block_size=block_size, blocks_per_partition=bpp,
                               q_len=q_len, num_groups=G)
    return pl.pallas_call(
        kernel,
        grid_spec=grid_spec,
        out_shape=jax.ShapeDtypeStruct((q_len, kv * G * d), jnp.bfloat16),
        compiler_params=pltpu.CompilerParams(
            dimension_semantics=("parallel",)),   # KV heads across TCs on v7x
    )(block_tables, seq_position, q, k_new, v_new, k_cache, v_cache)


# ----------------------------- module wrapper -----------------------------

class DecoderOnlyFlashAttentionPallas:
    """JAX/Pallas equivalent of DecoderOnlyFlashAttention (prefill, causal, no mask,
    Llama-style bias-free projections). Weights and paged KV cache held in bf16."""

    def __init__(self, hidden_size, num_heads, num_key_value_heads, head_dim,
                 kvcache_partition_len, kvcache_block_size, key):
        self.num_heads = num_heads
        self.num_key_value_heads = num_key_value_heads
        self.head_dim = head_dim
        self.kvcache_partition_size = kvcache_partition_len
        self.kvcache_block_size = kvcache_block_size
        self.scale = 1.0 / math.sqrt(head_dim)
        k1, k2, k3, k4 = jax.random.split(key, 4)
        std = 0.02
        # PyTorch nn.Linear weight is [out, in]; stored here pre-transposed as [in, out].
        self.wq = (jax.random.normal(k1, (hidden_size, num_heads * head_dim)) * std).astype(jnp.bfloat16)
        self.wk = (jax.random.normal(k2, (hidden_size, num_key_value_heads * head_dim)) * std).astype(jnp.bfloat16)
        self.wv = (jax.random.normal(k3, (hidden_size, num_key_value_heads * head_dim)) * std).astype(jnp.bfloat16)
        self.wo = (jax.random.normal(k4, (num_heads * head_dim, hidden_size)) * std).astype(jnp.bfloat16)
        # fused QKV weight: one matmul reads the activation once
        self.wqkv = jnp.concatenate([self.wq, self.wk, self.wv], axis=1)

    def __call__(self, hidden_states, attention_mask, seq_positions,
                 past_key_values, cos=None, sin=None, block_tables=None):
        batch_size, q_len, _ = hidden_states.shape
        assert batch_size == 1, "prefill phase requires batch size 1"
        H, KV, D = self.num_heads, self.num_key_value_heads, self.head_dim
        G = H // KV

        h2d = hidden_states[0]                                    # [Q, hidden]
        qkv = linear(h2d, self.wqkv, out_dtype=jnp.bfloat16)      # [Q, (H+2KV)*D]
        q = qkv[:, :H * D]
        k = qkv[:, H * D:(H + KV) * D]
        v = qkv[:, (H + KV) * D:]

        q = q.reshape(1, q_len, H, D).transpose(0, 2, 1, 3)       # [1, H, Q, D]
        k = k.reshape(1, q_len, KV, D).transpose(0, 2, 1, 3)      # [1, KV, Q, D]
        v = v.reshape(1, q_len, KV, D).transpose(0, 2, 1, 3)

        if cos is not None and sin is not None:
            q, k = apply_rotary_pos_emb(q.astype(jnp.float32), k.astype(jnp.float32),
                                        cos, sin)
        # TODO(synk): fuse RoPE (pltpu.roll + sign mask) and head split into the
        # projection kernel epilogue to drop these extra XLA passes over activations.

        # grouped-query layout: [KV, G*Q, D] (row = g*Q + qi), bf16 for the MXU
        q_g = q[0].reshape(KV, G * q_len, D).astype(jnp.bfloat16)
        k_new = k[0].astype(jnp.bfloat16)
        v_new = v[0].astype(jnp.bfloat16)

        k_cache, v_cache = past_key_values[0]                     # layer_idx = 0 (bf16)

        attn = paged_flash_causal_attn_prefill(
            q_g, k_new, v_new, k_cache, v_cache, block_tables, seq_positions,
            scale=self.scale, block_size=self.kvcache_block_size,
            partition_len=self.kvcache_partition_size)            # [Q, H*D] bf16
        # TODO(synk): the RBLN custom op also writes the new K/V into the paged cache
        # in-place; that side effect is not modeled (module forward only returns attn).

        out = linear(attn, self.wo, out_dtype=jnp.float32)[None]  # [1, Q, hidden]
        return out


# ----------------------------- pure-JAX reference -----------------------------

def reference_forward(mod, hidden_states, seq_positions, past_key_values,
                      cos, sin, block_tables):
    H, KV, D = mod.num_heads, mod.num_key_value_heads, mod.head_dim
    _, Q, _ = hidden_states.shape
    G = H // KV
    wq = mod.wq.astype(jnp.float32)
    wk = mod.wk.astype(jnp.float32)
    wv = mod.wv.astype(jnp.float32)
    wo = mod.wo.astype(jnp.float32)
    h2d = hidden_states[0]
    q = (h2d @ wq).reshape(1, Q, H, D).transpose(0, 2, 1, 3)
    k = (h2d @ wk).reshape(1, Q, KV, D).transpose(0, 2, 1, 3)
    v = (h2d @ wv).reshape(1, Q, KV, D).transpose(0, 2, 1, 3)
    q, k = apply_rotary_pos_emb(q, k, cos, sin)

    k_cache = past_key_values[0][0].astype(jnp.float32)
    v_cache = past_key_values[0][1].astype(jnp.float32)
    sp = int(seq_positions[0])
    kc = jnp.transpose(k_cache[block_tables], (1, 0, 2, 3)).reshape(KV, -1, D)[:, :sp]
    vc = jnp.transpose(v_cache[block_tables], (1, 0, 2, 3)).reshape(KV, -1, D)[:, :sp]

    outs = []
    for h in range(H):
        kvh = h // G
        keys = jnp.concatenate([kc[kvh], k[0, kvh]], axis=0)      # [sp+Q, D]
        vals = jnp.concatenate([vc[kvh], v[0, kvh]], axis=0)
        s = (q[0, h] @ keys.T) * mod.scale                        # [Q, sp+Q]
        key_idx = jnp.arange(sp + Q)[None, :]
        q_idx = jnp.arange(Q)[:, None]
        mask = (key_idx < sp) | ((key_idx - sp) <= q_idx)
        s = jnp.where(mask, s, -1e30)
        p = jax.nn.softmax(s, axis=-1)
        outs.append(p @ vals)
    attn = jnp.stack(outs, 0)                                     # [H, Q, D]
    attn = jnp.transpose(attn, (1, 0, 2)).reshape(1, Q, H * D)
    return attn @ wo


# ----------------------------- main -----------------------------

if __name__ == "__main__":
    key = jax.random.PRNGKey(0)
    HIDDEN, H, KV, D = 256, 4, 2, 128      # D=128 keeps attention output lane-dense
    Q = 64                                 # query_length: G*Q = 128 MXU rows per KV head
    BLOCK_SIZE = 64                        # kvcache_block_size (16 KiB per DMA)
    PARTITION = 256                        # kvcache_partition_len (multiple of 256)
    NUM_PHYS_BLOCKS = 12
    NLB = 8                                # logical cache blocks (512-key capacity)
    SEQ_POS = 300                          # partition 0 full, partition 1 partial

    kmod, kx, kkc, kvc, kbt = jax.random.split(key, 5)
    mod = DecoderOnlyFlashAttentionPallas(HIDDEN, H, KV, D, PARTITION, BLOCK_SIZE, kmod)

    hidden_states = jax.random.normal(kx, (1, Q, HIDDEN), dtype=jnp.float32)
    k_cache = jax.random.normal(kkc, (NUM_PHYS_BLOCKS, KV, BLOCK_SIZE, D)).astype(jnp.bfloat16)
    v_cache = jax.random.normal(kvc, (NUM_PHYS_BLOCKS, KV, BLOCK_SIZE, D)).astype(jnp.bfloat16)
    block_tables = jax.random.permutation(kbt, NUM_PHYS_BLOCKS)[:NLB].astype(jnp.int32)
    seq_positions = jnp.array([SEQ_POS], dtype=jnp.int32)

    # RoPE tables for query positions [SEQ_POS, SEQ_POS + Q)
    pos = SEQ_POS + jnp.arange(Q, dtype=jnp.float32)
    inv_freq = 1.0 / (10000.0 ** (jnp.arange(0, D, 2, dtype=jnp.float32) / D))
    freqs = pos[:, None] * inv_freq[None, :]
    emb = jnp.concatenate([freqs, freqs], axis=-1)                # [Q, D]
    cos = jnp.cos(emb)[None, None]                                # [1, 1, Q, D]
    sin = jnp.sin(emb)[None, None]

    past_key_values = ((k_cache, v_cache),)

    out = mod(hidden_states, None, seq_positions, past_key_values,
              cos=cos, sin=sin, block_tables=block_tables)
    out = jax.block_until_ready(out)

    ref = reference_forward(mod, hidden_states, seq_positions, past_key_values,
                            cos, sin, block_tables)
    err = float(jnp.max(jnp.abs(out - ref)))
    # bf16 activations/MXU inputs (weights/cache shared with the f32 reference) and the
    # approx reciprocal are the only numerical differences; 3e-2 gives ample margin.
    assert err < 3e-2, f"max abs err {err}"
    print("KERNEL_OK")
</pallas_src>

<mosaic_0001>
module attributes {stable_mosaic.version = 11 : i64} {
  func.func @_matmul_kernel(%arg0: i32, %arg1: i32, %arg2: i32, %arg3: memref<64x256xbf16, #tpu.memory_space<vmem>>, %arg4: memref<256x1024xbf16, #tpu.memory_space<vmem>>, %arg5: memref<64x1024xbf16, #tpu.memory_space<vmem>>, %arg6: memref<64x1024xf32, #tpu.memory_space<vmem>>) attributes {dimension_semantics = [#tpu.dimension_semantics<parallel>, #tpu.dimension_semantics<parallel>, #tpu.dimension_semantics<arbitrary>], iteration_bounds = array<i64: 1, 1, 1>, scalar_prefetch = 0 : i64, scratch_operands = 1 : i64, tpu.core_type = #tpu.core_type<tc>, window_params = [{transform_indices = @transform_0, window_bounds = array<i64: 64, 256>}, {transform_indices = @transform_1, window_bounds = array<i64: 256, 1024>}, {transform_indices = @transform_2, window_bounds = array<i64: 64, 1024>}]} {
    %c0_i32 = arith.constant 0 : i32
    %0 = arith.cmpi eq, %arg2, %c0_i32 : i32
    %1 = arith.extui %0 : i1 to i32
    %c0_i32_0 = arith.constant 0 : i32
    %2 = arith.cmpi ne, %1, %c0_i32_0 : i32
    scf.if %2 {
      %cst_10 = arith.constant 0.000000e+00 : f32
      %12 = vector.broadcast %cst_10 : f32 to vector<64x1024xf32>
      %c0_11 = arith.constant 0 : index
      %c0_12 = arith.constant 0 : index
      %13 = vector.load %arg6[%c0_11, %c0_12] : memref<64x1024xf32, #tpu.memory_space<vmem>>, vector<64x1024xf32>
      tpu.vector_store %arg6[%c0_11, %c0_12], %12 {strides = array<i32>} : memref<64x1024xf32, #tpu.memory_space<vmem>>, vector<64x1024xf32>,
    } else {
    }
    %c0 = arith.constant 0 : index
    %c0_1 = arith.constant 0 : index
    %3 = vector.load %arg6[%c0, %c0_1] : memref<64x1024xf32, #tpu.memory_space<vmem>>, vector<64x1024xf32>
    %c0_2 = arith.constant 0 : index
    %c0_3 = arith.constant 0 : index
    %4 = vector.load %arg3[%c0_2, %c0_3] : memref<64x256xbf16, #tpu.memory_space<vmem>>, vector<64x256xbf16>
    %c0_4 = arith.constant 0 : index
    %c0_5 = arith.constant 0 : index
    %5 = vector.load %arg4[%c0_4, %c0_5] : memref<256x1024xbf16, #tpu.memory_space<vmem>>, vector<256x1024xbf16>
    %cst = arith.constant dense<0.000000e+00> : vector<64x1024xf32>
    %6 = tpu.matmul %4, %5, %cst {dimension_numbers = #tpu.dot_dimension_numbers<[1], [0], [0], [1], [0, 0, 1, 1], [], []>} : vector<64x256xbf16>, vector<256x1024xbf16>, vector<64x1024xf32> -> vector<64x1024xf32>
    %7 = arith.addf %3, %6 : vector<64x1024xf32>
    %c0_6 = arith.constant 0 : index
    %c0_7 = arith.constant 0 : index
    %8 = vector.load %arg6[%c0_6, %c0_7] : memref<64x1024xf32, #tpu.memory_space<vmem>>, vector<64x1024xf32>
    tpu.vector_store %arg6[%c0_6, %c0_7], %7 {strides = array<i32>} : memref<64x1024xf32, #tpu.memory_space<vmem>>, vector<64x1024xf32>,
    %c0_i32_8 = arith.constant 0 : i32
    %9 = arith.cmpi eq, %arg2, %c0_i32_8 : i32
    %10 = arith.extui %9 : i1 to i32
    %c0_i32_9 = arith.constant 0 : i32
    %11 = arith.cmpi ne, %10, %c0_i32_9 : i32
    scf.if %11 {
      %c0_10 = arith.constant 0 : index
      %c0_11 = arith.constant 0 : index
      %12 = vector.load %arg6[%c0_10, %c0_11] : memref<64x1024xf32, #tpu.memory_space<vmem>>, vector<64x1024xf32>
      %13 = arith.truncf %12 : vector<64x1024xf32> to vector<64x1024xbf16>
      %c0_12 = arith.constant 0 : index
      %c0_13 = arith.constant 0 : index
      %14 = vector.load %arg5[%c0_12, %c0_13] : memref<64x1024xbf16, #tpu.memory_space<vmem>>, vector<64x1024xbf16>
      tpu.vector_store %arg5[%c0_12, %c0_13], %13 {strides = array<i32>} : memref<64x1024xbf16, #tpu.memory_space<vmem>>, vector<64x1024xbf16>,
    } else {
    }
    return
  }
  func.func @transform_0(%arg0: i32, %arg1: i32, %arg2: i32) -> (i32, i32) {
    %c0_i32 = arith.constant 0 : i32
    return %arg0, %arg2 : i32, i32
  }
  func.func @transform_1(%arg0: i32, %arg1: i32, %arg2: i32) -> (i32, i32) {
    %c0_i32 = arith.constant 0 : i32
    return %arg2, %arg1 : i32, i32
  }
  func.func @transform_2(%arg0: i32, %arg1: i32, %arg2: i32) -> (i32, i32) {
    %c0_i32 = arith.constant 0 : i32
    return %arg0, %arg1 : i32, i32
  }
}

</mosaic_0001>

<llo_original>
// kernel: tpu_custom_call.1
$region0: #{tpu_custom_call.1}
  #allocation0 [shape = 'u32[]', space=smem, size = 0x4, offset = 0x4, fixed_abs, tag = 'smem constant byte address 0x4 - core index']
  #allocation1 [shape = 'u32[72,128]{1,0:T(1,128)}', space=vmem, size = 0x9000, scoped, tag = 'internal scratch']
  #allocation2 [shape = 'f32[64,1024]{1,0:T(8,128)}', space=vmem, size = 0x40000, scoped, tag = 'scratch operand']
  %s0 = inlined_call_operand.hbm [shape: bf16[64,256], index: 0, kind: input, shape index: {}]
  %s1 = inlined_call_operand.hbm [shape: bf16[256,1024], index: 1, kind: input, shape index: {}]
  %s2 = inlined_call_operand.hbm [shape: bf16[64,1024], index: 2, kind: output, shape index: {}]
  %s3 = sld [smem:[#allocation0]]
  $region34: #{tpu_custom_call.1} parent=0
    _
  %s5 = ssub.s32 1, %s3
  %s6 = scalar_select 0, %s5, %s3
  $region1: #{tpu_custom_call.1} parent=0
    #allocation3 [shape = 'u8[32768]{0}', space=vmem, size = 0x8000, scoped, tag = 'input window, operand 0, single buffered']
    #allocation4 [shape = 's32[1]{0}', space=sflag, size = 0x4, scoped, tag = 'scoped memory for tpu_custom_call.1']
    #allocation5 [shape = 's32[1]{0}', space=sflag, size = 0x4, scoped, tag = 'scoped memory for tpu_custom_call.1']
    #allocation6 [shape = 'u8[524288]{0}', space=vmem, size = 0x80000, scoped, tag = 'input window, operand 1, single buffered']
    #allocation7 [shape = 's32[1]{0}', space=sflag, size = 0x4, scoped, tag = 'scoped memory for tpu_custom_call.1']
    #allocation8 [shape = 'u8[131072]{0}', space=vmem, size = 0x20000, scoped, tag = 'output window, operand 0, single buffered']
    %7 = vsyncpa [#allocation4], 0
    %8 = vsyncpa [#allocation7], 0
    %9 = vsyncpa [#allocation5], 0
    // Predicated region
    $region2: #{tpu_custom_call.1} parent=1 // pred_check
      _
    $region3: #{tpu_custom_call.1} parent=1 // pred_check_branch
      %11 = sbr.rel (0) target = $region5
    $region4: #{tpu_custom_call.1} parent=1 // pred_region
      %13 = vsyncadd [#allocation4], 0
      %s14 = sshll.u32 %s0, 4
      %s15 = int_to_ptr.hbm [resolvable:$true] %s14
      %s16 = sshll.u32 [#allocation3], 4
      %s17 = int_to_ptr.vmem [resolvable:$true] %s16
      %22 = dma.hbm_to_vmem [thread:$0]  %s15, 1024, %s17, [#allocation4], 128, 128, 8
    $region5: #{tpu_custom_call.1} parent=1 // pred_fallthru
      _
    // Predicated region
    $region6: #{tpu_custom_call.1} parent=1 // pred_check
      _
    $region7: #{tpu_custom_call.1} parent=1 // pred_check_branch
      %24 = sbr.rel (0) target = $region9
    $region8: #{tpu_custom_call.1} parent=1 // pred_region
      %26 = vsyncadd [#allocation7], 0
      %s27 = sshll.u32 %s1, 4
      %s28 = int_to_ptr.hbm [resolvable:$true] %s27
      %s29 = sshll.u32 [#allocation6], 4
      %s30 = int_to_ptr.vmem [resolvable:$true] %s29
      %35 = dma.hbm_to_vmem [thread:$0]  %s28, 16384, %s30, [#allocation7], 512, 512, 32
    $region9: #{tpu_custom_call.1} parent=1 // pred_fallthru
      _
    // Predicated region
    $region10: #{tpu_custom_call.1} parent=1 // pred_check
      _
    $region11: #{tpu_custom_call.1} parent=1 // pred_check_branch
      %37 = sbr.rel (0) target = $region13
    $region12: #{tpu_custom_call.1} parent=1 // pred_region
      %39 = dma.done [#allocation4], 1024
    $region13: #{tpu_custom_call.1} parent=1 // pred_fallthru
      _
    // Predicated region
    $region14: #{tpu_custom_call.1} parent=1 // pred_check
      _
    $region15: #{tpu_custom_call.1} parent=1 // pred_check_branch
      %41 = sbr.rel (0) target = $region17
    $region16: #{tpu_custom_call.1} parent=1 // pred_region
      %43 = dma.done [#allocation7], 16384
    $region17: #{tpu_custom_call.1} parent=1 // pred_fallthru
      _
    %p44 = scmp.eq.s32.totalorder 0, 0
    // Predicated region
    $region18: #{tpu_custom_call.1} parent=1 // pred_check
      %p45 = pneg %p44
    $region19: #{tpu_custom_call.1} parent=1 // pred_check_branch
      %47 = sbr.rel (%p45) target = $region21
    $region20: #{tpu_custom_call.1} parent=1 // pred_region
      %48 = vst [vmem:[#allocation2] sm:$0xff] 0.0
      %49 = vst [vmem:[#allocation2 + $0x8] sm:$0xff] 0.0
      %50 = vst [vmem:[#allocation2 + $0x10] sm:$0xff] 0.0
      %51 = vst [vmem:[#allocation2 + $0x18] sm:$0xff] 0.0
      %52 = vst [vmem:[#allocation2 + $0x20] sm:$0xff] 0.0
      %53 = vst [vmem:[#allocation2 + $0x28] sm:$0xff] 0.0
      %54 = vst [vmem:[#allocation2 + $0x30] sm:$0xff] 0.0
      %55 = vst [vmem:[#allocation2 + $0x38] sm:$0xff] 0.0
      %56 = vst [vmem:[#allocation2 + $0x40] sm:$0xff] 0.0
      %57 = vst [vmem:[#allocation2 + $0x48] sm:$0xff] 0.0
      %58 = vst [vmem:[#allocation2 + $0x50] sm:$0xff] 0.0
      %59 = vst [vmem:[#allocation2 + $0x58] sm:$0xff] 0.0
      %60 = vst [vmem:[#allocation2 + $0x60] sm:$0xff] 0.0
      %61 = vst [vmem:[#allocation2 + $0x68] sm:$0xff] 0.0
      %62 = vst [vmem:[#allocation2 + $0x70] sm:$0xff] 0.0
      %63 = vst [vmem:[#allocation2 + $0x78] sm:$0xff] 0.0
      %64 = vst [vmem:[#allocation2 + $0x80] sm:$0xff] 0.0
      %65 = vst [vmem:[#allocation2 + $0x88] sm:$0xff] 0.0
      %66 = vst [vmem:[#allocation2 + $0x90] sm:$0xff] 0.0
      %67 = vst [vmem:[#allocation2 + $0x98] sm:$0xff] 0.0
      %68 = vst [vmem:[#allocation2 + $0xa0] sm:$0xff] 0.0
      %69 = vst [vmem:[#allocation2 + $0xa8] sm:$0xff] 0.0
      %70 = vst [vmem:[#allocation2 + $0xb0] sm:$0xff] 0.0
      %71 = vst [vmem:[#allocation2 + $0xb8] sm:$0xff] 0.0
      %72 = vst [vmem:[#allocation2 + $0xc0] sm:$0xff] 0.0
      %73 = vst [vmem:[#allocation2 + $0xc8] sm:$0xff] 0.0
      %74 = vst [vmem:[#allocation2 + $0xd0] sm:$0xff] 0.0
      %75 = vst [vmem:[#allocation2 + $0xd8] sm:$0xff] 0.0
      %76 = vst [vmem:[#allocation2 + $0xe0] sm:$0xff] 0.0
      %77 = vst [vmem:[#allocation2 + $0xe8] sm:$0xff] 0.0
      %78 = vst [vmem:[#allocation2 + $0xf0] sm:$0xff] 0.0
      %79 = vst [vmem:[#allocation2 + $0xf8] sm:$0xff] 0.0
      %80 = vst [vmem:[#allocation2 + $0x100] sm:$0xff] 0.0
      %81 = vst [vmem:[#allocation2 + $0x108] sm:$0xff] 0.0
      %82 = vst [vmem:[#allocation2 + $0x110] sm:$0xff] 0.0
      %83 = vst [vmem:[#allocation2 + $0x118] sm:$0xff] 0.0
      %84 = vst [vmem:[#allocation2 + $0x120] sm:$0xff] 0.0
      %85 = vst [vmem:[#allocation2 + $0x128] sm:$0xff] 0.0
      %86 = vst [vmem:[#allocation2 + $0x130] sm:$0xff] 0.0
      %87 = vst [vmem:[#allocation2 + $0x138] sm:$0xff] 0.0
      %88 = vst [vmem:[#allocation2 + $0x140] sm:$0xff] 0.0
      %89 = vst [vmem:[#allocation2 + $0x148] sm:$0xff] 0.0
      %90 = vst [vmem:[#allocation2 + $0x150] sm:$0xff] 0.0
      %91 = vst [vmem:[#allocation2 + $0x158] sm:$0xff] 0.0
      %92 = vst [vmem:[#allocation2 + $0x160] sm:$0xff] 0.0
      %93 = vst [vmem:[#allocation2 + $0x168] sm:$0xff] 0.0
      %94 = vst [vmem:[#allocation2 + $0x170] sm:$0xff] 0.0
      %95 = vst [vmem:[#allocation2 + $0x178] sm:$0xff] 0.0
      %96 = vst [vmem:[#allocation2 + $0x180] sm:$0xff] 0.0
      %97 = vst [vmem:[#allocation2 + $0x188] sm:$0xff] 0.0
      %98 = vst [vmem:[#allocation2 + $0x190] sm:$0xff] 0.0
      %99 = vst [vmem:[#allocation2 + $0x198] sm:$0xff] 0.0
      %100 = vst [vmem:[#allocation2 + $0x1a0] sm:$0xff] 0.0
      %101 = vst [vmem:[#allocation2 + $0x1a8] sm:$0xff] 0.0
      %102 = vst [vmem:[#allocation2 + $0x1b0] sm:$0xff] 0.0
      %103 = vst [vmem:[#allocation2 + $0x1b8] sm:$0xff] 0.0
      %104 = vst [vmem:[#allocation2 + $0x1c0] sm:$0xff] 0.0
      %105 = vst [vmem:[#allocation2 + $0x1c8] sm:$0xff] 0.0
      %106 = vst [vmem:[#allocation2 + $0x1d0] sm:$0xff] 0.0
      %107 = vst [vmem:[#allocation2 + $0x1d8] sm:$0xff] 0.0
      %108 = vst [vmem:[#allocation2 + $0x1e0] sm:$0xff] 0.0
      %109 = vst [vmem:[#allocation2 + $0x1e8] sm:$0xff] 0.0
      %110 = vst [vmem:[#allocation2 + $0x1f0] sm:$0xff] 0.0
      %111 = vst [vmem:[#allocation2 + $0x1f8] sm:$0xff] 0.0
    $region21: #{tpu_custom_call.1} parent=1 // pred_fallthru
      _
    %v112 = vld [vmem:[#allocation2] sm:$0xff]
    %v113 = vld [vmem:[#allocation2 + $0x8] sm:$0xff]
    %v114 = vld [vmem:[#allocation2 + $0x10] sm:$0xff]
    %v115 = vld [vmem:[#allocation2 + $0x18] sm:$0xff]
    %v116 = vld [vmem:[#allocation2 + $0x20] sm:$0xff]
    %v117 = vld [vmem:[#allocation2 + $0x28] sm:$0xff]
    %v118 = vld [vmem:[#allocation2 + $0x30] sm:$0xff]
    %v119 = vld [vmem:[#allocation2 + $0x38] sm:$0xff]
    %v120 = vld [vmem:[#allocation2 + $0x40] sm:$0xff]
    %v121 = vld [vmem:[#allocation2 + $0x48] sm:$0xff]
    %v122 = vld [vmem:[#allocation2 + $0x50] sm:$0xff]
    %v123 = vld [vmem:[#allocation2 + $0x58] sm:$0xff]
    %v124 = vld [vmem:[#allocation2 + $0x60] sm:$0xff]
    %v125 = vld [vmem:[#allocation2 + $0x68] sm:$0xff]
    %v126 = vld [vmem:[#allocation2 + $0x70] sm:$0xff]
    %v127 = vld [vmem:[#allocation2 + $0x78] sm:$0xff]
    %v128 = vld [vmem:[#allocation2 + $0x80] sm:$0xff]
    %v129 = vld [vmem:[#allocation2 + $0x88] sm:$0xff]
    %v130 = vld [vmem:[#allocation2 + $0x90] sm:$0xff]
    %v131 = vld [vmem:[#allocation2 + $0x98] sm:$0xff]
    %v132 = vld [vmem:[#allocation2 + $0xa0] sm:$0xff]
    %v133 = vld [vmem:[#allocation2 + $0xa8] sm:$0xff]
    %v134 = vld [vmem:[#allocation2 + $0xb0] sm:$0xff]
    %v135 = vld [vmem:[#allocation2 + $0xb8] sm:$0xff]
    %v136 = vld [vmem:[#allocation2 + $0xc0] sm:$0xff]
    %v137 = vld [vmem:[#allocation2 + $0xc8] sm:$0xff]
    %v138 = vld [vmem:[#allocation2 + $0xd0] sm:$0xff]
    %v139 = vld [vmem:[#allocation2 + $0xd8] sm:$0xff]
    %v140 = vld [vmem:[#allocation2 + $0xe0] sm:$0xff]
    %v141 = vld [vmem:[#allocation2 + $0xe8] sm:$0xff]
    %v142 = vld [vmem:[#allocation2 + $0xf0] sm:$0xff]
    %v143 = vld [vmem:[#allocation2 + $0xf8] sm:$0xff]
    %v144 = vld [vmem:[#allocation2 + $0x100] sm:$0xff]
    %v145 = vld [vmem:[#allocation2 + $0x108] sm:$0xff]
    %v146 = vld [vmem:[#allocation2 + $0x110] sm:$0xff]
    %v147 = vld [vmem:[#allocation2 + $0x118] sm:$0xff]
    %v148 = vld [vmem:[#allocation2 + $0x120] sm:$0xff]
    %v149 = vld [vmem:[#allocation2 + $0x128] sm:$0xff]
    %v150 = vld [vmem:[#allocation2 + $0x130] sm:$0xff]
    %v151 = vld [vmem:[#allocation2 + $0x138] sm:$0xff]
    %v152 = vld [vmem:[#allocation2 + $0x140] sm:$0xff]
    %v153 = vld [vmem:[#allocation2 + $0x148] sm:$0xff]
    %v154 = vld [vmem:[#allocation2 + $0x150] sm:$0xff]
    %v155 = vld [vmem:[#allocation2 + $0x158] sm:$0xff]
    %v156 = vld [vmem:[#allocation2 + $0x160] sm:$0xff]
    %v157 = vld [vmem:[#allocation2 + $0x168] sm:$0xff]
    %v158 = vld [vmem:[#allocation2 + $0x170] sm:$0xff]
    %v159 = vld [vmem:[#allocation2 + $0x178] sm:$0xff]
    %v160 = vld [vmem:[#allocation2 + $0x180] sm:$0xff]
    %v161 = vld [vmem:[#allocation2 + $0x188] sm:$0xff]
    %v162 = vld [vmem:[#allocation2 + $0x190] sm:$0xff]
    %v163 = vld [vmem:[#allocation2 + $0x198] sm:$0xff]
    %v164 = vld [vmem:[#allocation2 + $0x1a0] sm:$0xff]
    %v165 = vld [vmem:[#allocation2 + $0x1a8] sm:$0xff]
    %v166 = vld [vmem:[#allocation2 + $0x1b0] sm:$0xff]
    %v167 = vld [vmem:[#allocation2 + $0x1b8] sm:$0xff]
    %v168 = vld [vmem:[#allocation2 + $0x1c0] sm:$0xff]
    %v169 = vld [vmem:[#allocation2 + $0x1c8] sm:$0xff]
    %v170 = vld [vmem:[#allocation2 + $0x1d0] sm:$0xff]
    %v171 = vld [vmem:[#allocation2 + $0x1d8] sm:$0xff]
    %v172 = vld [vmem:[#allocation2 + $0x1e0] sm:$0xff]
    %v173 = vld [vmem:[#allocation2 + $0x1e8] sm:$0xff]
    %v174 = vld [vmem:[#allocation2 + $0x1f0] sm:$0xff]
    %v175 = vld [vmem:[#allocation2 + $0x1f8] sm:$0xff]
    %v176 = vld [vmem:[#allocation3] sm:$0xff]
    %v177 = vld [vmem:[#allocation3 + $0x8] sm:$0xff]
    %v178 = vld [vmem:[#allocation3 + $0x10] sm:$0xff]
    %v179 = vld [vmem:[#allocation3 + $0x18] sm:$0xff]
    %v180 = vld [vmem:[#allocation3 + $0x20] sm:$0xff]
    %v181 = vld [vmem:[#allocation3 + $0x28] sm:$0xff]
    %v182 = vld [vmem:[#allocation3 + $0x30] sm:$0xff]
    %v183 = vld [vmem:[#allocation3 + $0x38] sm:$0xff]
    %v184 = vld [vmem:[#allocation6] sm:$0xff]
    %v185 = vld [vmem:[#allocation6 + $0x8] sm:$0xff]
    %v186 = vld [vmem:[#allocation6 + $0x10] sm:$0xff]
    %v187 = vld [vmem:[#allocation6 + $0x18] sm:$0xff]
    %v188 = vld [vmem:[#allocation6 + $0x20] sm:$0xff]
    %v189 = vld [vmem:[#allocation6 + $0x28] sm:$0xff]
    %v190 = vld [vmem:[#allocation6 + $0x30] sm:$0xff]
    %v191 = vld [vmem:[#allocation6 + $0x38] sm:$0xff]
    %v192 = vld [vmem:[#allocation6 + $0x40] sm:$0xff]
    %v193 = vld [vmem:[#allocation6 + $0x48] sm:$0xff]
    %v194 = vld [vmem:[#allocation6 + $0x50] sm:$0xff]
    %v195 = vld [vmem:[#allocation6 + $0x58] sm:$0xff]
    %v196 = vld [vmem:[#allocation6 + $0x60] sm:$0xff]
    %v197 = vld [vmem:[#allocation6 + $0x68] sm:$0xff]
    %v198 = vld [vmem:[#allocation6 + $0x70] sm:$0xff]
    %v199 = vld [vmem:[#allocation6 + $0x78] sm:$0xff]
    %v200 = vld [vmem:[#allocation6 + $0x80] sm:$0xff]
    %v201 = vld [vmem:[#allocation6 + $0x88] sm:$0xff]
    %v202 = vld [vmem:[#allocation6 + $0x90] sm:$0xff]
    %v203 = vld [vmem:[#allocation6 + $0x98] sm:$0xff]
    %v204 = vld [vmem:[#allocation6 + $0xa0] sm:$0xff]
    %v205 = vld [vmem:[#allocation6 + $0xa8] sm:$0xff]
    %v206 = vld [vmem:[#allocation6 + $0xb0] sm:$0xff]
    %v207 = vld [vmem:[#allocation6 + $0xb8] sm:$0xff]
    %v208 = vld [vmem:[#allocation6 + $0xc0] sm:$0xff]
    %v209 = vld [vmem:[#allocation6 + $0xc8] sm:$0xff]
    %v210 = vld [vmem:[#allocation6 + $0xd0] sm:$0xff]
    %v211 = vld [vmem:[#allocation6 + $0xd8] sm:$0xff]
    %v212 = vld [vmem:[#allocation6 + $0xe0] sm:$0xff]
    %v213 = vld [vmem:[#allocation6 + $0xe8] sm:$0xff]
    %v214 = vld [vmem:[#allocation6 + $0xf0] sm:$0xff]
    %v215 = vld [vmem:[#allocation6 + $0xf8] sm:$0xff]
    %v216 = vld [vmem:[#allocation6 + $0x100] sm:$0xff]
    %v217 = vld [vmem:[#allocation6 + $0x108] sm:$0xff]
    %v218 = vld [vmem:[#allocation6 + $0x110] sm:$0xff]
    %v219 = vld [vmem:[#allocation6 + $0x118] sm:$0xff]
    %v220 = vld [vmem:[#allocation6 + $0x120] sm:$0xff]
    %v221 = vld [vmem:[#allocation6 + $0x128] sm:$0xff]
    %v222 = vld [vmem:[#allocation6 + $0x130] sm:$0xff]
    %v223 = vld [vmem:[#allocation6 + $0x138] sm:$0xff]
    %v224 = vld [vmem:[#allocation6 + $0x140] sm:$0xff]
    %v225 = vld [vmem:[#allocation6 + $0x148] sm:$0xff]
    %v226 = vld [vmem:[#allocation6 + $0x150] sm:$0xff]
    %v227 = vld [vmem:[#allocation6 + $0x158] sm:$0xff]
    %v228 = vld [vmem:[#allocation6 + $0x160] sm:$0xff]
    %v229 = vld [vmem:[#allocation6 + $0x168] sm:$0xff]
    %v230 = vld [vmem:[#allocation6 + $0x170] sm:$0xff]
    %v231 = vld [vmem:[#allocation6 + $0x178] sm:$0xff]
    %v232 = vld [vmem:[#allocation6 + $0x180] sm:$0xff]
    %v233 = vld [vmem:[#allocation6 + $0x188] sm:$0xff]
    %v234 = vld [vmem:[#allocation6 + $0x190] sm:$0xff]
    %v235 = vld [vmem:[#allocation6 + $0x198] sm:$0xff]
    %v236 = vld [vmem:[#allocation6 + $0x1a0] sm:$0xff]
    %v237 = vld [vmem:[#allocation6 + $0x1a8] sm:$0xff]
    %v238 = vld [vmem:[#allocation6 + $0x1b0] sm:$0xff]
    %v239 = vld [vmem:[#allocation6 + $0x1b8] sm:$0xff]
    %v240 = vld [vmem:[#allocation6 + $0x1c0] sm:$0xff]
    %v241 = vld [vmem:[#allocation6 + $0x1c8] sm:$0xff]
    %v242 = vld [vmem:[#allocation6 + $0x1d0] sm:$0xff]
    %v243 = vld [vmem:[#allocation6 + $0x1d8] sm:$0xff]
    %v244 = vld [vmem:[#allocation6 + $0x1e0] sm:$0xff]
    %v245 = vld [vmem:[#allocation6 + $0x1e8] sm:$0xff]
    %v246 = vld [vmem:[#allocation6 + $0x1f0] sm:$0xff]
    %v247 = vld [vmem:[#allocation6 + $0x1f8] sm:$0xff]
    %v248 = vld [vmem:[#allocation6 + $0x200] sm:$0xff]
    %v249 = vld [vmem:[#allocation6 + $0x208] sm:$0xff]
    %v250 = vld [vmem:[#allocation6 + $0x210] sm:$0xff]
    %v251 = vld [vmem:[#allocation6 + $0x218] sm:$0xff]
    %v252 = vld [vmem:[#allocation6 + $0x220] sm:$0xff]
    %v253 = vld [vmem:[#allocation6 + $0x228] sm:$0xff]
    %v254 = vld [vmem:[#allocation6 + $0x230] sm:$0xff]
    %v255 = vld [vmem:[#allocation6 + $0x238] sm:$0xff]
    %v256 = vld [vmem:[#allocation6 + $0x240] sm:$0xff]
    %v257 = vld [vmem:[#allocation6 + $0x248] sm:$0xff]
    %v258 = vld [vmem:[#allocation6 + $0x250] sm:$0xff]
    %v259 = vld [vmem:[#allocation6 + $0x258] sm:$0xff]
    %v260 = vld [vmem:[#allocation6 + $0x260] sm:$0xff]
    %v261 = vld [vmem:[#allocation6 + $0x268] sm:$0xff]
    %v262 = vld [vmem:[#allocation6 + $0x270] sm:$0xff]
    %v263 = vld [vmem:[#allocation6 + $0x278] sm:$0xff]
    %v264 = vld [vmem:[#allocation6 + $0x280] sm:$0xff]
    %v265 = vld [vmem:[#allocation6 + $0x288] sm:$0xff]
    %v266 = vld [vmem:[#allocation6 + $0x290] sm:$0xff]
    %v267 = vld [vmem:[#allocation6 + $0x298] sm:$0xff]
    %v268 = vld [vmem:[#allocation6 + $0x2a0] sm:$0xff]
    %v269 = vld [vmem:[#allocation6 + $0x2a8] sm:$0xff]
    %v270 = vld [vmem:[#allocation6 + $0x2b0] sm:$0xff]
    %v271 = vld [vmem:[#allocation6 + $0x2b8] sm:$0xff]
    %v272 = vld [vmem:[#allocation6 + $0x2c0] sm:$0xff]
    %v273 = vld [vmem:[#allocation6 + $0x2c8] sm:$0xff]
    %v274 = vld [vmem:[#allocation6 + $0x2d0] sm:$0xff]
    %v275 = vld [vmem:[#allocation6 + $0x2d8] sm:$0xff]
    %v276 = vld [vmem:[#allocation6 + $0x2e0] sm:$0xff]
    %v277 = vld [vmem:[#allocation6 + $0x2e8] sm:$0xff]
    %v278 = vld [vmem:[#allocation6 + $0x2f0] sm:$0xff]
    %v279 = vld [vmem:[#allocation6 + $0x2f8] sm:$0xff]
    %v280 = vld [vmem:[#allocation6 + $0x300] sm:$0xff]
    %v281 = vld [vmem:[#allocation6 + $0x308] sm:$0xff]
    %v282 = vld [vmem:[#allocation6 + $0x310] sm:$0xff]
    %v283 = vld [vmem:[#allocation6 + $0x318] sm:$0xff]
    %v284 = vld [vmem:[#allocation6 + $0x320] sm:$0xff]
    %v285 = vld [vmem:[#allocation6 + $0x328] sm:$0xff]
    %v286 = vld [vmem:[#allocation6 + $0x330] sm:$0xff]
    %v287 = vld [vmem:[#allocation6 + $0x338] sm:$0xff]
    %v288 = vld [vmem:[#allocation6 + $0x340] sm:$0xff]
    %v289 = vld [vmem:[#allocation6 + $0x348] sm:$0xff]
    %v290 = vld [vmem:[#allocation6 + $0x350] sm:$0xff]
    %v291 = vld [vmem:[#allocation6 + $0x358] sm:$0xff]
    %v292 = vld [vmem:[#allocation6 + $0x360] sm:$0xff]
    %v293 = vld [vmem:[#allocation6 + $0x368] sm:$0xff]
    %v294 = vld [vmem:[#allocation6 + $0x370] sm:$0xff]
    %v295 = vld [vmem:[#allocation6 + $0x378] sm:$0xff]
    %v296 = vld [vmem:[#allocation6 + $0x380] sm:$0xff]
    %v297 = vld [vmem:[#allocation6 + $0x388] sm:$0xff]
    %v298 = vld [vmem:[#allocation6 + $0x390] sm:$0xff]
    %v299 = vld [vmem:[#allocation6 + $0x398] sm:$0xff]
    %v300 = vld [vmem:[#allocation6 + $0x3a0] sm:$0xff]
    %v301 = vld [vmem:[#allocation6 + $0x3a8] sm:$0xff]
    %v302 = vld [vmem:[#allocation6 + $0x3b0] sm:$0xff]
    %v303 = vld [vmem:[#allocation6 + $0x3b8] sm:$0xff]
    %v304 = vld [vmem:[#allocation6 + $0x3c0] sm:$0xff]
    %v305 = vld [vmem:[#allocation6 + $0x3c8] sm:$0xff]
    %v306 = vld [vmem:[#allocation6 + $0x3d0] sm:$0xff]
    %v307 = vld [vmem:[#allocation6 + $0x3d8] sm:$0xff]
    %v308 = vld [vmem:[#allocation6 + $0x3e0] sm:$0xff]
    %v309 = vld [vmem:[#allocation6 + $0x3e8] sm:$0xff]
    %v310 = vld [vmem:[#allocation6 + $0x3f0] sm:$0xff]
    %v311 = vld [vmem:[#allocation6 + $0x3f8] sm:$0xff]
    %v320 = vunpack.c.l.b16 %v176
    %v321 = vunpack.c.h.b16 %v176
    %v322 = vunpack.c.l.b16 %v177
    %v323 = vunpack.c.h.b16 %v177
    %v324 = vunpack.c.l.b16 %v178
    %v325 = vunpack.c.h.b16 %v178
    %v326 = vunpack.c.l.b16 %v179
    %v327 = vunpack.c.h.b16 %v179
    %v328 = vunpack.c.l.b16 %v180
    %v329 = vunpack.c.h.b16 %v180
    %v330 = vunpack.c.l.b16 %v181
    %v331 = vunpack.c.h.b16 %v181
    %v332 = vunpack.c.l.b16 %v182
    %v333 = vunpack.c.h.b16 %v182
    %v334 = vunpack.c.l.b16 %v183
    %v335 = vunpack.c.h.b16 %v183
    %v336 = vpack.c.b16 %v322, %v320
    %v337 = vpack.c.b16 %v323, %v321
    %v338 = vpack.c.b16 %v326, %v324
    %v339 = vpack.c.b16 %v327, %v325
    %v340 = vpack.c.b16 %v330, %v328
    %v341 = vpack.c.b16 %v331, %v329
    %v342 = vpack.c.b16 %v334, %v332
    %v343 = vpack.c.b16 %v335, %v333
    %v480 = vunpack.c.l.b16 %v184
    %v481 = vunpack.c.h.b16 %v184
    %v482 = vunpack.c.l.b16 %v185
    %v483 = vunpack.c.h.b16 %v185
    %v484 = vunpack.c.l.b16 %v186
    %v485 = vunpack.c.h.b16 %v186
    %v486 = vunpack.c.l.b16 %v187
    %v487 = vunpack.c.h.b16 %v187
    %v488 = vunpack.c.l.b16 %v188
    %v489 = vunpack.c.h.b16 %v188
    %v490 = vunpack.c.l.b16 %v189
    %v491 = vunpack.c.h.b16 %v189
    %v492 = vunpack.c.l.b16 %v190
    %v493 = vunpack.c.h.b16 %v190
    %v494 = vunpack.c.l.b16 %v191
    %v495 = vunpack.c.h.b16 %v191
    %v496 = vunpack.c.l.b16 %v192
    %v497 = vunpack.c.h.b16 %v192
    %v498 = vunpack.c.l.b16 %v193
    %v499 = vunpack.c.h.b16 %v193
    %v500 = vunpack.c.l.b16 %v194
    %v501 = vunpack.c.h.b16 %v194
    %v502 = vunpack.c.l.b16 %v195
    %v503 = vunpack.c.h.b16 %v195
    %v504 = vunpack.c.l.b16 %v196
    %v505 = vunpack.c.h.b16 %v196
    %v506 = vunpack.c.l.b16 %v197
    %v507 = vunpack.c.h.b16 %v197
    %v508 = vunpack.c.l.b16 %v198
    %v509 = vunpack.c.h.b16 %v198
    %v510 = vunpack.c.l.b16 %v199
    %v511 = vunpack.c.h.b16 %v199
    %v512 = vunpack.c.l.b16 %v200
    %v513 = vunpack.c.h.b16 %v200
    %v514 = vunpack.c.l.b16 %v201
    %v515 = vunpack.c.h.b16 %v201
    %v516 = vunpack.c.l.b16 %v202
    %v517 = vunpack.c.h.b16 %v202
    %v518 = vunpack.c.l.b16 %v203
    %v519 = vunpack.c.h.b16 %v203
    %v520 = vunpack.c.l.b16 %v204
    %v521 = vunpack.c.h.b16 %v204
    %v522 = vunpack.c.l.b16 %v205
    %v523 = vunpack.c.h.b16 %v205
    %v524 = vunpack.c.l.b16 %v206
    %v525 = vunpack.c.h.b16 %v206
    %v526 = vunpack.c.l.b16 %v207
    %v527 = vunpack.c.h.b16 %v207
    %v528 = vunpack.c.l.b16 %v208
    %v529 = vunpack.c.h.b16 %v208
    %v530 = vunpack.c.l.b16 %v209
    %v531 = vunpack.c.h.b16 %v209
    %v532 = vunpack.c.l.b16 %v210
    %v533 = vunpack.c.h.b16 %v210
    %v534 = vunpack.c.l.b16 %v211
    %v535 = vunpack.c.h.b16 %v211
    %v536 = vunpack.c.l.b16 %v212
    %v537 = vunpack.c.h.b16 %v212
    %v538 = vunpack.c.l.b16 %v213
    %v539 = vunpack.c.h.b16 %v213
    %v540 = vunpack.c.l.b16 %v214
    %v541 = vunpack.c.h.b16 %v214
    %v542 = vunpack.c.l.b16 %v215
    %v543 = vunpack.c.h.b16 %v215
    %v544 = vunpack.c.l.b16 %v216
    %v545 = vunpack.c.h.b16 %v216
    %v546 = vunpack.c.l.b16 %v217
    %v547 = vunpack.c.h.b16 %v217
    %v548 = vunpack.c.l.b16 %v218
    %v549 = vunpack.c.h.b16 %v218
    %v550 = vunpack.c.l.b16 %v219
    %v551 = vunpack.c.h.b16 %v219
    %v552 = vunpack.c.l.b16 %v220
    %v553 = vunpack.c.h.b16 %v220
    %v554 = vunpack.c.l.b16 %v221
    %v555 = vunpack.c.h.b16 %v221
    %v556 = vunpack.c.l.b16 %v222
    %v557 = vunpack.c.h.b16 %v222
    %v558 = vunpack.c.l.b16 %v223
    %v559 = vunpack.c.h.b16 %v223
    %v560 = vunpack.c.l.b16 %v224
    %v561 = vunpack.c.h.b16 %v224
    %v562 = vunpack.c.l.b16 %v225
    %v563 = vunpack.c.h.b16 %v225
    %v564 = vunpack.c.l.b16 %v226
    %v565 = vunpack.c.h.b16 %v226
    %v566 = vunpack.c.l.b16 %v227
    %v567 = vunpack.c.h.b16 %v227
    %v568 = vunpack.c.l.b16 %v228
    %v569 = vunpack.c.h.b16 %v228
    %v570 = vunpack.c.l.b16 %v229
    %v571 = vunpack.c.h.b16 %v229
    %v572 = vunpack.c.l.b16 %v230
    %v573 = vunpack.c.h.b16 %v230
    %v574 = vunpack.c.l.b16 %v231
    %v575 = vunpack.c.h.b16 %v231
    %v576 = vunpack.c.l.b16 %v232
    %v577 = vunpack.c.h.b16 %v232
    %v578 = vunpack.c.l.b16 %v233
    %v579 = vunpack.c.h.b16 %v233
    %v580 = vunpack.c.l.b16 %v234
    %v581 = vunpack.c.h.b16 %v234
    %v582 = vunpack.c.l.b16 %v235
    %v583 = vunpack.c.h.b16 %v235
    %v584 = vunpack.c.l.b16 %v236
    %v585 = vunpack.c.h.b16 %v236
    %v586 = vunpack.c.l.b16 %v237
    %v587 = vunpack.c.h.b16 %v237
    %v588 = vunpack.c.l.b16 %v238
    %v589 = vunpack.c.h.b16 %v238
    %v590 = vunpack.c.l.b16 %v239
    %v591 = vunpack.c.h.b16 %v239
    %v592 = vunpack.c.l.b16 %v240
    %v593 = vunpack.c.h.b16 %v240
    %v594 = vunpack.c.l.b16 %v241
    %v595 = vunpack.c.h.b16 %v241
    %v596 = vunpack.c.l.b16 %v242
    %v597 = vunpack.c.h.b16 %v242
    %v598 = vunpack.c.l.b16 %v243
    %v599 = vunpack.c.h.b16 %v243
    %v600 = vunpack.c.l.b16 %v244
    %v601 = vunpack.c.h.b16 %v244
    %v602 = vunpack.c.l.b16 %v245
    %v603 = vunpack.c.h.b16 %v245
    %v604 = vunpack.c.l.b16 %v246
    %v605 = vunpack.c.h.b16 %v246
    %v606 = vunpack.c.l.b16 %v247
    %v607 = vunpack.c.h.b16 %v247
    %v608 = vunpack.c.l.b16 %v248
    %v609 = vunpack.c.h.b16 %v248
    %v610 = vunpack.c.l.b16 %v249
    %v611 = vunpack.c.h.b16 %v249
    %v612 = vunpack.c.l.b16 %v250
    %v613 = vunpack.c.h.b16 %v250
    %v614 = vunpack.c.l.b16 %v251
    %v615 = vunpack.c.h.b16 %v251
    %v616 = vunpack.c.l.b16 %v252
    %v617 = vunpack.c.h.b16 %v252
    %v618 = vunpack.c.l.b16 %v253
    %v619 = vunpack.c.h.b16 %v253
    %v620 = vunpack.c.l.b16 %v254
    %v621 = vunpack.c.h.b16 %v254
    %v622 = vunpack.c.l.b16 %v255
    %v623 = vunpack.c.h.b16 %v255
    %v624 = vunpack.c.l.b16 %v256
    %v625 = vunpack.c.h.b16 %v256
    %v626 = vunpack.c.l.b16 %v257
    %v627 = vunpack.c.h.b16 %v257
    %v628 = vunpack.c.l.b16 %v258
    %v629 = vunpack.c.h.b16 %v258
    %v630 = vunpack.c.l.b16 %v259
    %v631 = vunpack.c.h.b16 %v259
    %v632 = vunpack.c.l.b16 %v260
    %v633 = vunpack.c.h.b16 %v260
    %v634 = vunpack.c.l.b16 %v261
    %v635 = vunpack.c.h.b16 %v261
    %v636 = vunpack.c.l.b16 %v262
    %v637 = vunpack.c.h.b16 %v262
    %v638 = vunpack.c.l.b16 %v263
    %v639 = vunpack.c.h.b16 %v263
    %v640 = vunpack.c.l.b16 %v264
    %v641 = vunpack.c.h.b16 %v264
    %v642 = vunpack.c.l.b16 %v265
    %v643 = vunpack.c.h.b16 %v265
    %v644 = vunpack.c.l.b16 %v266
    %v645 = vunpack.c.h.b16 %v266
    %v646 = vunpack.c.l.b16 %v267
    %v647 = vunpack.c.h.b16 %v267
    %v648 = vunpack.c.l.b16 %v268
    %v649 = vunpack.c.h.b16 %v268
    %v650 = vunpack.c.l.b16 %v269
    %v651 = vunpack.c.h.b16 %v269
    %v652 = vunpack.c.l.b16 %v270
    %v653 = vunpack.c.h.b16 %v270
    %v654 = vunpack.c.l.b16 %v271
    %v655 = vunpack.c.h.b16 %v271
    %v656 = vunpack.c.l.b16 %v272
    %v657 = vunpack.c.h.b16 %v272
    %v658 = vunpack.c.l.b16 %v273
    %v659 = vunpack.c.h.b16 %v273
    %v660 = vunpack.c.l.b16 %v274
    %v661 = vunpack.c.h.b16 %v274
    %v662 = vunpack.c.l.b16 %v275
    %v663 = vunpack.c.h.b16 %v275
    %v664 = vunpack.c.l.b16 %v276
    %v665 = vunpack.c.h.b16 %v276
    %v666 = vunpack.c.l.b16 %v277
    %v667 = vunpack.c.h.b16 %v277
    %v668 = vunpack.c.l.b16 %v278
    %v669 = vunpack.c.h.b16 %v278
    %v670 = vunpack.c.l.b16 %v279
    %v671 = vunpack.c.h.b16 %v279
    %v672 = vunpack.c.l.b16 %v280
    %v673 = vunpack.c.h.b16 %v280
    %v674 = vunpack.c.l.b16 %v281
    %v675 = vunpack.c.h.b16 %v281
    %v676 = vunpack.c.l.b16 %v282
    %v677 = vunpack.c.h.b16 %v282
    %v678 = vunpack.c.l.b16 %v283
    %v679 = vunpack.c.h.b16 %v283
    %v680 = vunpack.c.l.b16 %v284
    %v681 = vunpack.c.h.b16 %v284
    %v682 = vunpack.c.l.b16 %v285
    %v683 = vunpack.c.h.b16 %v285
    %v684 = vunpack.c.l.b16 %v286
    %v685 = vunpack.c.h.b16 %v286
    %v686 = vunpack.c.l.b16 %v287
    %v687 = vunpack.c.h.b16 %v287
    %v688 = vunpack.c.l.b16 %v288
    %v689 = vunpack.c.h.b16 %v288
    %v690 = vunpack.c.l.b16 %v289
    %v691 = vunpack.c.h.b16 %v289
    %v692 = vunpack.c.l.b16 %v290
    %v693 = vunpack.c.h.b16 %v290
    %v694 = vunpack.c.l.b16 %v291
    %v695 = vunpack.c.h.b16 %v291
    %v696 = vunpack.c.l.b16 %v292
    %v697 = vunpack.c.h.b16 %v292
    %v698 = vunpack.c.l.b16 %v293
    %v699 = vunpack.c.h.b16 %v293
    %v700 = vunpack.c.l.b16 %v294
    %v701 = vunpack.c.h.b16 %v294
    %v702 = vunpack.c.l.b16 %v295
    %v703 = vunpack.c.h.b16 %v295
    %v704 = vunpack.c.l.b16 %v296
    %v705 = vunpack.c.h.b16 %v296
    %v706 = vunpack.c.l.b16 %v297
    %v707 = vunpack.c.h.b16 %v297
    %v708 = vunpack.c.l.b16 %v298
    %v709 = vunpack.c.h.b16 %v298
    %v710 = vunpack.c.l.b16 %v299
    %v711 = vunpack.c.h.b16 %v299
    %v712 = vunpack.c.l.b16 %v300
    %v713 = vunpack.c.h.b16 %v300
    %v714 = vunpack.c.l.b16 %v301
    %v715 = vunpack.c.h.b16 %v301
    %v716 = vunpack.c.l.b16 %v302
    %v717 = vunpack.c.h.b16 %v302
    %v718 = vunpack.c.l.b16 %v303
    %v719 = vunpack.c.h.b16 %v303
    %v720 = vunpack.c.l.b16 %v304
    %v721 = vunpack.c.h.b16 %v304
    %v722 = vunpack.c.l.b16 %v305
    %v723 = vunpack.c.h.b16 %v305
    %v724 = vunpack.c.l.b16 %v306
    %v725 = vunpack.c.h.b16 %v306
    %v726 = vunpack.c.l.b16 %v307
    %v727 = vunpack.c.h.b16 %v307
    %v728 = vunpack.c.l.b16 %v308
    %v729 = vunpack.c.h.b16 %v308
    %v730 = vunpack.c.l.b16 %v309
    %v731 = vunpack.c.h.b16 %v309
    %v732 = vunpack.c.l.b16 %v310
    %v733 = vunpack.c.h.b16 %v310
    %v734 = vunpack.c.l.b16 %v311
    %v735 = vunpack.c.h.b16 %v311
    %v736 = vpack.c.b16 %v488, %v480
    %v737 = vpack.c.b16 %v489, %v481
    %v738 = vpack.c.b16 %v490, %v482
    %v739 = vpack.c.b16 %v491, %v483
    %v740 = vpack.c.b16 %v492, %v484
    %v741 = vpack.c.b16 %v493, %v485
    %v742 = vpack.c.b16 %v494, %v486
    %v743 = vpack.c.b16 %v495, %v487
    %v744 = vpack.c.b16 %v504, %v496
    %v745 = vpack.c.b16 %v505, %v497
    %v746 = vpack.c.b16 %v506, %v498
    %v747 = vpack.c.b16 %v507, %v499
    %v748 = vpack.c.b16 %v508, %v500
    %v749 = vpack.c.b16 %v509, %v501
    %v750 = vpack.c.b16 %v510, %v502
    %v751 = vpack.c.b16 %v511, %v503
    %v752 = vpack.c.b16 %v520, %v512
    %v753 = vpack.c.b16 %v521, %v513
    %v754 = vpack.c.b16 %v522, %v514
    %v755 = vpack.c.b16 %v523, %v515
    %v756 = vpack.c.b16 %v524, %v516
    %v757 = vpack.c.b16 %v525, %v517
    %v758 = vpack.c.b16 %v526, %v518
    %v759 = vpack.c.b16 %v527, %v519
    %v760 = vpack.c.b16 %v536, %v528
    %v761 = vpack.c.b16 %v537, %v529
    %v762 = vpack.c.b16 %v538, %v530
    %v763 = vpack.c.b16 %v539, %v531
    %v764 = vpack.c.b16 %v540, %v532
    %v765 = vpack.c.b16 %v541, %v533
    %v766 = vpack.c.b16 %v542, %v534
    %v767 = vpack.c.b16 %v543, %v535
    %v768 = vpack.c.b16 %v552, %v544
    %v769 = vpack.c.b16 %v553, %v545
    %v770 = vpack.c.b16 %v554, %v546
    %v771 = vpack.c.b16 %v555, %v547
    %v772 = vpack.c.b16 %v556, %v548
    %v773 = vpack.c.b16 %v557, %v549
    %v774 = vpack.c.b16 %v558, %v550
    %v775 = vpack.c.b16 %v559, %v551
    %v776 = vpack.c.b16 %v568, %v560
    %v777 = vpack.c.b16 %v569, %v561
    %v778 = vpack.c.b16 %v570, %v562
    %v779 = vpack.c.b16 %v571, %v563
    %v780 = vpack.c.b16 %v572, %v564
    %v781 = vpack.c.b16 %v573, %v565
    %v782 = vpack.c.b16 %v574, %v566
    %v783 = vpack.c.b16 %v575, %v567
    %v784 = vpack.c.b16 %v584, %v576
    %v785 = vpack.c.b16 %v585, %v577
    %v786 = vpack.c.b16 %v586, %v578
    %v787 = vpack.c.b16 %v587, %v579
    %v788 = vpack.c.b16 %v588, %v580
    %v789 = vpack.c.b16 %v589, %v581
    %v790 = vpack.c.b16 %v590, %v582
    %v791 = vpack.c.b16 %v591, %v583
    %v792 = vpack.c.b16 %v600, %v592
    %v793 = vpack.c.b16 %v601, %v593
    %v794 = vpack.c.b16 %v602, %v594
    %v795 = vpack.c.b16 %v603, %v595
    %v796 = vpack.c.b16 %v604, %v596
    %v797 = vpack.c.b16 %v605, %v597
    %v798 = vpack.c.b16 %v606, %v598
    %v799 = vpack.c.b16 %v607, %v599
    %v800 = vpack.c.b16 %v616, %v608
    %v801 = vpack.c.b16 %v617, %v609
    %v802 = vpack.c.b16 %v618, %v610
    %v803 = vpack.c.b16 %v619, %v611
    %v804 = vpack.c.b16 %v620, %v612
    %v805 = vpack.c.b16 %v621, %v613
    %v806 = vpack.c.b16 %v622, %v614
    %v807 = vpack.c.b16 %v623, %v615
    %v808 = vpack.c.b16 %v632, %v624
    %v809 = vpack.c.b16 %v633, %v625
    %v810 = vpack.c.b16 %v634, %v626
    %v811 = vpack.c.b16 %v635, %v627
    %v812 = vpack.c.b16 %v636, %v628
    %v813 = vpack.c.b16 %v637, %v629
    %v814 = vpack.c.b16 %v638, %v630
    %v815 = vpack.c.b16 %v639, %v631
    %v816 = vpack.c.b16 %v648, %v640
    %v817 = vpack.c.b16 %v649, %v641
    %v818 = vpack.c.b16 %v650, %v642
    %v819 = vpack.c.b16 %v651, %v643
    %v820 = vpack.c.b16 %v652, %v644
    %v821 = vpack.c.b16 %v653, %v645
    %v822 = vpack.c.b16 %v654, %v646
    %v823 = vpack.c.b16 %v655, %v647
    %v824 = vpack.c.b16 %v664, %v656
    %v825 = vpack.c.b16 %v665, %v657
    %v826 = vpack.c.b16 %v666, %v658
    %v827 = vpack.c.b16 %v667, %v659
    %v828 = vpack.c.b16 %v668, %v660
    %v829 = vpack.c.b16 %v669, %v661
    %v830 = vpack.c.b16 %v670, %v662
    %v831 = vpack.c.b16 %v671, %v663
    %v832 = vpack.c.b16 %v680, %v672
    %v833 = vpack.c.b16 %v681, %v673
    %v834 = vpack.c.b16 %v682, %v674
    %v835 = vpack.c.b16 %v683, %v675
    %v836 = vpack.c.b16 %v684, %v676
    %v837 = vpack.c.b16 %v685, %v677
    %v838 = vpack.c.b16 %v686, %v678
    %v839 = vpack.c.b16 %v687, %v679
    %v840 = vpack.c.b16 %v696, %v688
    %v841 = vpack.c.b16 %v697, %v689
    %v842 = vpack.c.b16 %v698, %v690
    %v843 = vpack.c.b16 %v699, %v691
    %v844 = vpack.c.b16 %v700, %v692
    %v845 = vpack.c.b16 %v701, %v693
    %v846 = vpack.c.b16 %v702, %v694
    %v847 = vpack.c.b16 %v703, %v695
    %v848 = vpack.c.b16 %v712, %v704
    %v849 = vpack.c.b16 %v713, %v705
    %v850 = vpack.c.b16 %v714, %v706
    %v851 = vpack.c.b16 %v715, %v707
    %v852 = vpack.c.b16 %v716, %v708
    %v853 = vpack.c.b16 %v717, %v709
    %v854 = vpack.c.b16 %v718, %v710
    %v855 = vpack.c.b16 %v719, %v711
    %v856 = vpack.c.b16 %v728, %v720
    %v857 = vpack.c.b16 %v729, %v721
    %v858 = vpack.c.b16 %v730, %v722
    %v859 = vpack.c.b16 %v731, %v723
    %v860 = vpack.c.b16 %v732, %v724
    %v861 = vpack.c.b16 %v733, %v725
    %v862 = vpack.c.b16 %v734, %v726
    %v863 = vpack.c.b16 %v735, %v727
    %992 = vmatpush.bf16.msra.mxu0 %v792
    %993 = vmatpush.bf16.msra.mxu0 %v784
    %994 = vmatpush.bf16.msra.mxu0 %v776
    %995 = vmatpush.bf16.msra.mxu0 %v768
    %996 = vmatpush.bf16.msra.mxu0 %v760
    %997 = vmatpush.bf16.msra.mxu0 %v752
    %998 = vmatpush.bf16.msra.mxu0 %v744
    %999 = vmatpush.bf16.msra.mxu0 %v736
    %1000 = vmatmul.bf16.gmra.mxu0 %v336
    %v1001 = vpop.f32.mrf.mxu0
    %v1002 = vadd.f32 0.0, %v1001
    %v1003 = vpop.f32.mrf.mxu0
    %v1004 = vadd.f32 0.0, %v1003
    %1005 = vmatmul.bf16.gmra.mxu0 %v338
    %v1006 = vpop.f32.mrf.mxu0
    %v1007 = vadd.f32 0.0, %v1006
    %v1008 = vpop.f32.mrf.mxu0
    %v1009 = vadd.f32 0.0, %v1008
    %1010 = vmatmul.bf16.gmra.mxu0 %v340
    %v1011 = vpop.f32.mrf.mxu0
    %v1012 = vadd.f32 0.0, %v1011
    %v1013 = vpop.f32.mrf.mxu0
    %v1014 = vadd.f32 0.0, %v1013
    %1015 = vmatmul.bf16.gmra.mxu0 %v342
    %v1016 = vpop.f32.mrf.mxu0
    %v1017 = vadd.f32 0.0, %v1016
    %v1018 = vpop.f32.mrf.mxu0
    %v1019 = vadd.f32 0.0, %v1018
    %1020 = vdwg.mxu0
    %1021 = vmatpush.bf16.msra.mxu0 %v856
    %1022 = vmatpush.bf16.msra.mxu0 %v848
    %1023 = vmatpush.bf16.msra.mxu0 %v840
    %1024 = vmatpush.bf16.msra.mxu0 %v832
    %1025 = vmatpush.bf16.msra.mxu0 %v824
    %1026 = vmatpush.bf16.msra.mxu0 %v816
    %1027 = vmatpush.bf16.msra.mxu0 %v808
    %1028 = vmatpush.bf16.msra.mxu0 %v800
    %1029 = vmatmul.bf16.gmra.mxu0 %v337
    %v1030 = vpop.f32.mrf.mxu0
    %v1031 = vadd.f32 %v1002, %v1030
    %v1032 = vpop.f32.mrf.mxu0
    %v1033 = vadd.f32 %v1004, %v1032
    %1034 = vmatmul.bf16.gmra.mxu0 %v339
    %v1035 = vpop.f32.mrf.mxu0
    %v1036 = vadd.f32 %v1007, %v1035
    %v1037 = vpop.f32.mrf.mxu0
    %v1038 = vadd.f32 %v1009, %v1037
    %1039 = vmatmul.bf16.gmra.mxu0 %v341
    %v1040 = vpop.f32.mrf.mxu0
    %v1041 = vadd.f32 %v1012, %v1040
    %v1042 = vpop.f32.mrf.mxu0
    %v1043 = vadd.f32 %v1014, %v1042
    %1044 = vmatmul.bf16.gmra.mxu0 %v343
    %v1045 = vpop.f32.mrf.mxu0
    %v1046 = vadd.f32 %v1017, %v1045
    %v1047 = vpop.f32.mrf.mxu0
    %v1048 = vadd.f32 %v1019, %v1047
    %1049 = vdwg.mxu0
    %1050 = vmatpush.bf16.msra.mxu0 %v793
    %1051 = vmatpush.bf16.msra.mxu0 %v785
    %1052 = vmatpush.bf16.msra.mxu0 %v777
    %1053 = vmatpush.bf16.msra.mxu0 %v769
    %1054 = vmatpush.bf16.msra.mxu0 %v761
    %1055 = vmatpush.bf16.msra.mxu0 %v753
    %1056 = vmatpush.bf16.msra.mxu0 %v745
    %1057 = vmatpush.bf16.msra.mxu0 %v737
    %1058 = vmatmul.bf16.gmra.mxu0 %v336
    %v1059 = vpop.f32.mrf.mxu0
    %v1060 = vadd.f32 0.0, %v1059
    %v1061 = vpop.f32.mrf.mxu0
    %v1062 = vadd.f32 0.0, %v1061
    %1063 = vmatmul.bf16.gmra.mxu0 %v338
    %v1064 = vpop.f32.mrf.mxu0
    %v1065 = vadd.f32 0.0, %v1064
    %v1066 = vpop.f32.mrf.mxu0
    %v1067 = vadd.f32 0.0, %v1066
    %1068 = vmatmul.bf16.gmra.mxu0 %v340
    %v1069 = vpop.f32.mrf.mxu0
    %v1070 = vadd.f32 0.0, %v1069
    %v1071 = vpop.f32.mrf.mxu0
    %v1072 = vadd.f32 0.0, %v1071
    %1073 = vmatmul.bf16.gmra.mxu0 %v342
    %v1074 = vpop.f32.mrf.mxu0
    %v1075 = vadd.f32 0.0, %v1074
    %v1076 = vpop.f32.mrf.mxu0
    %v1077 = vadd.f32 0.0, %v1076
    %1078 = vdwg.mxu0
    %1079 = vmatpush.bf16.msra.mxu0 %v857
    %1080 = vmatpush.bf16.msra.mxu0 %v849
    %1081 = vmatpush.bf16.msra.mxu0 %v841
    %1082 = vmatpush.bf16.msra.mxu0 %v833
    %1083 = vmatpush.bf16.msra.mxu0 %v825
    %1084 = vmatpush.bf16.msra.mxu0 %v817
    %1085 = vmatpush.bf16.msra.mxu0 %v809
    %1086 = vmatpush.bf16.msra.mxu0 %v801
    %1087 = vmatmul.bf16.gmra.mxu0 %v337
    %v1088 = vpop.f32.mrf.mxu0
    %v1089 = vadd.f32 %v1060, %v1088
    %v1090 = vpop.f32.mrf.mxu0
    %v1091 = vadd.f32 %v1062, %v1090
    %1092 = vmatmul.bf16.gmra.mxu0 %v339
    %v1093 = vpop.f32.mrf.mxu0
    %v1094 = vadd.f32 %v1065, %v1093
    %v1095 = vpop.f32.mrf.mxu0
    %v1096 = vadd.f32 %v1067, %v1095
    %1097 = vmatmul.bf16.gmra.mxu0 %v341
    %v1098 = vpop.f32.mrf.mxu0
    %v1099 = vadd.f32 %v1070, %v1098
    %v1100 = vpop.f32.mrf.mxu0
    %v1101 = vadd.f32 %v1072, %v1100
    %1102 = vmatmul.bf16.gmra.mxu0 %v343
    %v1103 = vpop.f32.mrf.mxu0
    %v1104 = vadd.f32 %v1075, %v1103
    %v1105 = vpop.f32.mrf.mxu0
    %v1106 = vadd.f32 %v1077, %v1105
    %1107 = vdwg.mxu0
    %1108 = vmatpush.bf16.msra.mxu0 %v794
    %1109 = vmatpush.bf16.msra.mxu0 %v786
    %1110 = vmatpush.bf16.msra.mxu0 %v778
    %1111 = vmatpush.bf16.msra.mxu0 %v770
    %1112 = vmatpush.bf16.msra.mxu0 %v762
    %1113 = vmatpush.bf16.msra.mxu0 %v754
    %1114 = vmatpush.bf16.msra.mxu0 %v746
    %1115 = vmatpush.bf16.msra.mxu0 %v738
    %1116 = vmatmul.bf16.gmra.mxu0 %v336
    %v1117 = vpop.f32.mrf.mxu0
    %v1118 = vadd.f32 0.0, %v1117
    %v1119 = vpop.f32.mrf.mxu0
    %v1120 = vadd.f32 0.0, %v1119
    %1121 = vmatmul.bf16.gmra.mxu0 %v338
    %v1122 = vpop.f32.mrf.mxu0
    %v1123 = vadd.f32 0.0, %v1122
    %v1124 = vpop.f32.mrf.mxu0
    %v1125 = vadd.f32 0.0, %v1124
    %1126 = vmatmul.bf16.gmra.mxu0 %v340
    %v1127 = vpop.f32.mrf.mxu0
    %v1128 = vadd.f32 0.0, %v1127
    %v1129 = vpop.f32.mrf.mxu0
    %v1130 = vadd.f32 0.0, %v1129
    %1131 = vmatmul.bf16.gmra.mxu0 %v342
    %v1132 = vpop.f32.mrf.mxu0
    %v1133 = vadd.f32 0.0, %v1132
    %v1134 = vpop.f32.mrf.mxu0
    %v1135 = vadd.f32 0.0, %v1134
    %1136 = vdwg.mxu0
    %1137 = vmatpush.bf16.msra.mxu0 %v858
    %1138 = vmatpush.bf16.msra.mxu0 %v850
    %1139 = vmatpush.bf16.msra.mxu0 %v842
    %1140 = vmatpush.bf16.msra.mxu0 %v834
    %1141 = vmatpush.bf16.msra.mxu0 %v826
    %1142 = vmatpush.bf16.msra.mxu0 %v818
    %1143 = vmatpush.bf16.msra.mxu0 %v810
    %1144 = vmatpush.bf16.msra.mxu0 %v802
    %1145 = vmatmul.bf16.gmra.mxu0 %v337
    %v1146 = vpop.f32.mrf.mxu0
    %v1147 = vadd.f32 %v1118, %v1146
    %v1148 = vpop.f32.mrf.mxu0
    %v1149 = vadd.f32 %v1120, %v1148
    %1150 = vmatmul.bf16.gmra.mxu0 %v339
    %v1151 = vpop.f32.mrf.mxu0
    %v1152 = vadd.f32 %v1123, %v1151
    %v1153 = vpop.f32.mrf.mxu0
    %v1154 = vadd.f32 %v1125, %v1153
    %1155 = vmatmul.bf16.gmra.mxu0 %v341
    %v1156 = vpop.f32.mrf.mxu0
    %v1157 = vadd.f32 %v1128, %v1156
    %v1158 = vpop.f32.mrf.mxu0
    %v1159 = vadd.f32 %v1130, %v1158
    %1160 = vmatmul.bf16.gmra.mxu0 %v343
    %v1161 = vpop.f32.mrf.mxu0
    %v1162 = vadd.f32 %v1133, %v1161
    %v1163 = vpop.f32.mrf.mxu0
    %v1164 = vadd.f32 %v1135, %v1163
    %1165 = vdwg.mxu0
    %1166 = vmatpush.bf16.msra.mxu0 %v795
    %1167 = vmatpush.bf16.msra.mxu0 %v787
    %1168 = vmatpush.bf16.msra.mxu0 %v779
    %1169 = vmatpush.bf16.msra.mxu0 %v771
    %1170 = vmatpush.bf16.msra.mxu0 %v763
    %1171 = vmatpush.bf16.msra.mxu0 %v755
    %1172 = vmatpush.bf16.msra.mxu0 %v747
    %1173 = vmatpush.bf16.msra.mxu0 %v739
    %1174 = vmatmul.bf16.gmra.mxu0 %v336
    %v1175 = vpop.f32.mrf.mxu0
    %v1176 = vadd.f32 0.0, %v1175
    %v1177 = vpop.f32.mrf.mxu0
    %v1178 = vadd.f32 0.0, %v1177
    %1179 = vmatmul.bf16.gmra.mxu0 %v338
    %v1180 = vpop.f32.mrf.mxu0
    %v1181 = vadd.f32 0.0, %v1180
    %v1182 = vpop.f32.mrf.mxu0
    %v1183 = vadd.f32 0.0, %v1182
    %1184 = vmatmul.bf16.gmra.mxu0 %v340
    %v1185 = vpop.f32.mrf.mxu0
    %v1186 = vadd.f32 0.0, %v1185
    %v1187 = vpop.f32.mrf.mxu0
    %v1188 = vadd.f32 0.0, %v1187
    %1189 = vmatmul.bf16.gmra.mxu0 %v342
    %v1190 = vpop.f32.mrf.mxu0
    %v1191 = vadd.f32 0.0, %v1190
    %v1192 = vpop.f32.mrf.mxu0
    %v1193 = vadd.f32 0.0, %v1192
    %1194 = vdwg.mxu0
    %1195 = vmatpush.bf16.msra.mxu0 %v859
    %1196 = vmatpush.bf16.msra.mxu0 %v851
    %1197 = vmatpush.bf16.msra.mxu0 %v843
    %1198 = vmatpush.bf16.msra.mxu0 %v835
    %1199 = vmatpush.bf16.msra.mxu0 %v827
    %1200 = vmatpush.bf16.msra.mxu0 %v819
    %1201 = vmatpush.bf16.msra.mxu0 %v811
    %1202 = vmatpush.bf16.msra.mxu0 %v803
    %1203 = vmatmul.bf16.gmra.mxu0 %v337
    %v1204 = vpop.f32.mrf.mxu0
    %v1205 = vadd.f32 %v1176, %v1204
    %v1206 = vpop.f32.mrf.mxu0
    %v1207 = vadd.f32 %v1178, %v1206
    %1208 = vmatmul.bf16.gmra.mxu0 %v339
    %v1209 = vpop.f32.mrf.mxu0
    %v1210 = vadd.f32 %v1181, %v1209
    %v1211 = vpop.f32.mrf.mxu0
    %v1212 = vadd.f32 %v1183, %v1211
    %1213 = vmatmul.bf16.gmra.mxu0 %v341
    %v1214 = vpop.f32.mrf.mxu0
    %v1215 = vadd.f32 %v1186, %v1214
    %v1216 = vpop.f32.mrf.mxu0
    %v1217 = vadd.f32 %v1188, %v1216
    %1218 = vmatmul.bf16.gmra.mxu0 %v343
    %v1219 = vpop.f32.mrf.mxu0
    %v1220 = vadd.f32 %v1191, %v1219
    %v1221 = vpop.f32.mrf.mxu0
    %v1222 = vadd.f32 %v1193, %v1221
    %1223 = vdwg.mxu0
    %1224 = vmatpush.bf16.msra.mxu0 %v796
    %1225 = vmatpush.bf16.msra.mxu0 %v788
    %1226 = vmatpush.bf16.msra.mxu0 %v780
    %1227 = vmatpush.bf16.msra.mxu0 %v772
    %1228 = vmatpush.bf16.msra.mxu0 %v764
    %1229 = vmatpush.bf16.msra.mxu0 %v756
    %1230 = vmatpush.bf16.msra.mxu0 %v748
    %1231 = vmatpush.bf16.msra.mxu0 %v740
    %1232 = vmatmul.bf16.gmra.mxu0 %v336
    %v1233 = vpop.f32.mrf.mxu0
    %v1234 = vadd.f32 0.0, %v1233
    %v1235 = vpop.f32.mrf.mxu0
    %v1236 = vadd.f32 0.0, %v1235
    %1237 = vmatmul.bf16.gmra.mxu0 %v338
    %v1238 = vpop.f32.mrf.mxu0
    %v1239 = vadd.f32 0.0, %v1238
    %v1240 = vpop.f32.mrf.mxu0
    %v1241 = vadd.f32 0.0, %v1240
    %1242 = vmatmul.bf16.gmra.mxu0 %v340
    %v1243 = vpop.f32.mrf.mxu0
    %v1244 = vadd.f32 0.0, %v1243
    %v1245 = vpop.f32.mrf.mxu0
    %v1246 = vadd.f32 0.0, %v1245
    %1247 = vmatmul.bf16.gmra.mxu0 %v342
    %v1248 = vpop.f32.mrf.mxu0
    %v1249 = vadd.f32 0.0, %v1248
    %v1250 = vpop.f32.mrf.mxu0
    %v1251 = vadd.f32 0.0, %v1250
    %1252 = vdwg.mxu0
    %1253 = vmatpush.bf16.msra.mxu0 %v860
    %1254 = vmatpush.bf16.msra.mxu0 %v852
    %1255 = vmatpush.bf16.msra.mxu0 %v844
    %1256 = vmatpush.bf16.msra.mxu0 %v836
    %1257 = vmatpush.bf16.msra.mxu0 %v828
    %1258 = vmatpush.bf16.msra.mxu0 %v820
    %1259 = vmatpush.bf16.msra.mxu0 %v812
    %1260 = vmatpush.bf16.msra.mxu0 %v804
    %1261 = vmatmul.bf16.gmra.mxu0 %v337
    %v1262 = vpop.f32.mrf.mxu0
    %v1263 = vadd.f32 %v1234, %v1262
    %v1264 = vpop.f32.mrf.mxu0
    %v1265 = vadd.f32 %v1236, %v1264
    %1266 = vmatmul.bf16.gmra.mxu0 %v339
    %v1267 = vpop.f32.mrf.mxu0
    %v1268 = vadd.f32 %v1239, %v1267
    %v1269 = vpop.f32.mrf.mxu0
    %v1270 = vadd.f32 %v1241, %v1269
    %1271 = vmatmul.bf16.gmra.mxu0 %v341
    %v1272 = vpop.f32.mrf.mxu0
    %v1273 = vadd.f32 %v1244, %v1272
    %v1274 = vpop.f32.mrf.mxu0
    %v1275 = vadd.f32 %v1246, %v1274
    %1276 = vmatmul.bf16.gmra.mxu0 %v343
    %v1277 = vpop.f32.mrf.mxu0
    %v1278 = vadd.f32 %v1249, %v1277
    %v1279 = vpop.f32.mrf.mxu0
    %v1280 = vadd.f32 %v1251, %v1279
    %1281 = vdwg.mxu0
    %1282 = vmatpush.bf16.msra.mxu0 %v797
    %1283 = vmatpush.bf16.msra.mxu0 %v789
    %1284 = vmatpush.bf16.msra.mxu0 %v781
    %1285 = vmatpush.bf16.msra.mxu0 %v773
    %1286 = vmatpush.bf16.msra.mxu0 %v765
    %1287 = vmatpush.bf16.msra.mxu0 %v757
    %1288 = vmatpush.bf16.msra.mxu0 %v749
    %1289 = vmatpush.bf16.msra.mxu0 %v741
    %1290 = vmatmul.bf16.gmra.mxu0 %v336
    %v1291 = vpop.f32.mrf.mxu0
    %v1292 = vadd.f32 0.0, %v1291
    %v1293 = vpop.f32.mrf.mxu0
    %v1294 = vadd.f32 0.0, %v1293
    %1295 = vmatmul.bf16.gmra.mxu0 %v338
    %v1296 = vpop.f32.mrf.mxu0
    %v1297 = vadd.f32 0.0, %v1296
    %v1298 = vpop.f32.mrf.mxu0
    %v1299 = vadd.f32 0.0, %v1298
    %1300 = vmatmul.bf16.gmra.mxu0 %v340
    %v1301 = vpop.f32.mrf.mxu0
    %v1302 = vadd.f32 0.0, %v1301
    %v1303 = vpop.f32.mrf.mxu0
    %v1304 = vadd.f32 0.0, %v1303
    %1305 = vmatmul.bf16.gmra.mxu0 %v342
    %v1306 = vpop.f32.mrf.mxu0
    %v1307 = vadd.f32 0.0, %v1306
    %v1308 = vpop.f32.mrf.mxu0
    %v1309 = vadd.f32 0.0, %v1308
    %1310 = vdwg.mxu0
    %1311 = vmatpush.bf16.msra.mxu0 %v861
    %1312 = vmatpush.bf16.msra.mxu0 %v853
    %1313 = vmatpush.bf16.msra.mxu0 %v845
    %1314 = vmatpush.bf16.msra.mxu0 %v837
    %1315 = vmatpush.bf16.msra.mxu0 %v829
    %1316 = vmatpush.bf16.msra.mxu0 %v821
    %1317 = vmatpush.bf16.msra.mxu0 %v813
    %1318 = vmatpush.bf16.msra.mxu0 %v805
    %1319 = vmatmul.bf16.gmra.mxu0 %v337
    %v1320 = vpop.f32.mrf.mxu0
    %v1321 = vadd.f32 %v1292, %v1320
    %v1322 = vpop.f32.mrf.mxu0
    %v1323 = vadd.f32 %v1294, %v1322
    %1324 = vmatmul.bf16.gmra.mxu0 %v339
    %v1325 = vpop.f32.mrf.mxu0
    %v1326 = vadd.f32 %v1297, %v1325
    %v1327 = vpop.f32.mrf.mxu0
    %v1328 = vadd.f32 %v1299, %v1327
    %1329 = vmatmul.bf16.gmra.mxu0 %v341
    %v1330 = vpop.f32.mrf.mxu0
    %v1331 = vadd.f32 %v1302, %v1330
    %v1332 = vpop.f32.mrf.mxu0
    %v1333 = vadd.f32 %v1304, %v1332
    %1334 = vmatmul.bf16.gmra.mxu0 %v343
    %v1335 = vpop.f32.mrf.mxu0
    %v1336 = vadd.f32 %v1307, %v1335
    %v1337 = vpop.f32.mrf.mxu0
    %v1338 = vadd.f32 %v1309, %v1337
    %1339 = vdwg.mxu0
    %1340 = vmatpush.bf16.msra.mxu0 %v798
    %1341 = vmatpush.bf16.msra.mxu0 %v790
    %1342 = vmatpush.bf16.msra.mxu0 %v782
    %1343 = vmatpush.bf16.msra.mxu0 %v774
    %1344 = vmatpush.bf16.msra.mxu0 %v766
    %1345 = vmatpush.bf16.msra.mxu0 %v758
    %1346 = vmatpush.bf16.msra.mxu0 %v750
    %1347 = vmatpush.bf16.msra.mxu0 %v742
    %1348 = vmatmul.bf16.gmra.mxu0 %v336
    %v1349 = vpop.f32.mrf.mxu0
    %v1350 = vadd.f32 0.0, %v1349
    %v1351 = vpop.f32.mrf.mxu0
    %v1352 = vadd.f32 0.0, %v1351
    %1353 = vmatmul.bf16.gmra.mxu0 %v338
    %v1354 = vpop.f32.mrf.mxu0
    %v1355 = vadd.f32 0.0, %v1354
    %v1356 = vpop.f32.mrf.mxu0
    %v1357 = vadd.f32 0.0, %v1356
    %1358 = vmatmul.bf16.gmra.mxu0 %v340
    %v1359 = vpop.f32.mrf.mxu0
    %v1360 = vadd.f32 0.0, %v1359
    %v1361 = vpop.f32.mrf.mxu0
    %v1362 = vadd.f32 0.0, %v1361
    %1363 = vmatmul.bf16.gmra.mxu0 %v342
    %v1364 = vpop.f32.mrf.mxu0
    %v1365 = vadd.f32 0.0, %v1364
    %v1366 = vpop.f32.mrf.mxu0
    %v1367 = vadd.f32 0.0, %v1366
    %1368 = vdwg.mxu0
    %1369 = vmatpush.bf16.msra.mxu0 %v862
    %1370 = vmatpush.bf16.msra.mxu0 %v854
    %1371 = vmatpush.bf16.msra.mxu0 %v846
    %1372 = vmatpush.bf16.msra.mxu0 %v838
    %1373 = vmatpush.bf16.msra.mxu0 %v830
    %1374 = vmatpush.bf16.msra.mxu0 %v822
    %1375 = vmatpush.bf16.msra.mxu0 %v814
    %1376 = vmatpush.bf16.msra.mxu0 %v806
    %1377 = vmatmul.bf16.gmra.mxu0 %v337
    %v1378 = vpop.f32.mrf.mxu0
    %v1379 = vadd.f32 %v1350, %v1378
    %v1380 = vpop.f32.mrf.mxu0
    %v1381 = vadd.f32 %v1352, %v1380
    %1382 = vmatmul.bf16.gmra.mxu0 %v339
    %v1383 = vpop.f32.mrf.mxu0
    %v1384 = vadd.f32 %v1355, %v1383
    %v1385 = vpop.f32.mrf.mxu0
    %v1386 = vadd.f32 %v1357, %v1385
    %1387 = vmatmul.bf16.gmra.mxu0 %v341
    %v1388 = vpop.f32.mrf.mxu0
    %v1389 = vadd.f32 %v1360, %v1388
    %v1390 = vpop.f32.mrf.mxu0
    %v1391 = vadd.f32 %v1362, %v1390
    %1392 = vmatmul.bf16.gmra.mxu0 %v343
    %v1393 = vpop.f32.mrf.mxu0
    %v1394 = vadd.f32 %v1365, %v1393
    %v1395 = vpop.f32.mrf.mxu0
    %v1396 = vadd.f32 %v1367, %v1395
    %1397 = vdwg.mxu0
    %1398 = vmatpush.bf16.msra.mxu0 %v799
    %1399 = vmatpush.bf16.msra.mxu0 %v791
    %1400 = vmatpush.bf16.msra.mxu0 %v783
    %1401 = vmatpush.bf16.msra.mxu0 %v775
    %1402 = vmatpush.bf16.msra.mxu0 %v767
    %1403 = vmatpush.bf16.msra.mxu0 %v759
    %1404 = vmatpush.bf16.msra.mxu0 %v751
    %1405 = vmatpush.bf16.msra.mxu0 %v743
    %1406 = vmatmul.bf16.gmra.mxu0 %v336
    %v1407 = vpop.f32.mrf.mxu0
    %v1408 = vadd.f32 0.0, %v1407
    %v1409 = vpop.f32.mrf.mxu0
    %v1410 = vadd.f32 0.0, %v1409
    %1411 = vmatmul.bf16.gmra.mxu0 %v338
    %v1412 = vpop.f32.mrf.mxu0
    %v1413 = vadd.f32 0.0, %v1412
    %v1414 = vpop.f32.mrf.mxu0
    %v1415 = vadd.f32 0.0, %v1414
    %1416 = vmatmul.bf16.gmra.mxu0 %v340
    %v1417 = vpop.f32.mrf.mxu0
    %v1418 = vadd.f32 0.0, %v1417
    %v1419 = vpop.f32.mrf.mxu0
    %v1420 = vadd.f32 0.0, %v1419
    %1421 = vmatmul.bf16.gmra.mxu0 %v342
    %v1422 = vpop.f32.mrf.mxu0
    %v1423 = vadd.f32 0.0, %v1422
    %v1424 = vpop.f32.mrf.mxu0
    %v1425 = vadd.f32 0.0, %v1424
    %1426 = vdwg.mxu0
    %1427 = vmatpush.bf16.msra.mxu0 %v863
    %1428 = vmatpush.bf16.msra.mxu0 %v855
    %1429 = vmatpush.bf16.msra.mxu0 %v847
    %1430 = vmatpush.bf16.msra.mxu0 %v839
    %1431 = vmatpush.bf16.msra.mxu0 %v831
    %1432 = vmatpush.bf16.msra.mxu0 %v823
    %1433 = vmatpush.bf16.msra.mxu0 %v815
    %1434 = vmatpush.bf16.msra.mxu0 %v807
    %1435 = vmatmul.bf16.gmra.mxu0 %v337
    %v1436 = vpop.f32.mrf.mxu0
    %v1437 = vadd.f32 %v1408, %v1436
    %v1438 = vpop.f32.mrf.mxu0
    %v1439 = vadd.f32 %v1410, %v1438
    %1440 = vmatmul.bf16.gmra.mxu0 %v339
    %v1441 = vpop.f32.mrf.mxu0
    %v1442 = vadd.f32 %v1413, %v1441
    %v1443 = vpop.f32.mrf.mxu0
    %v1444 = vadd.f32 %v1415, %v1443
    %1445 = vmatmul.bf16.gmra.mxu0 %v341
    %v1446 = vpop.f32.mrf.mxu0
    %v1447 = vadd.f32 %v1418, %v1446
    %v1448 = vpop.f32.mrf.mxu0
    %v1449 = vadd.f32 %v1420, %v1448
    %1450 = vmatmul.bf16.gmra.mxu0 %v343
    %v1451 = vpop.f32.mrf.mxu0
    %v1452 = vadd.f32 %v1423, %v1451
    %v1453 = vpop.f32.mrf.mxu0
    %v1454 = vadd.f32 %v1425, %v1453
    %1455 = vdwg.mxu0
    %v1456 = vadd.f32 %v112, %v1031
    %v1457 = vadd.f32 %v113, %v1089
    %v1458 = vadd.f32 %v114, %v1147
    %v1459 = vadd.f32 %v115, %v1205
    %v1460 = vadd.f32 %v116, %v1263
    %v1461 = vadd.f32 %v117, %v1321
    %v1462 = vadd.f32 %v118, %v1379
    %v1463 = vadd.f32 %v119, %v1437
    %v1464 = vadd.f32 %v120, %v1033
    %v1465 = vadd.f32 %v121, %v1091
    %v1466 = vadd.f32 %v122, %v1149
    %v1467 = vadd.f32 %v123, %v1207
    %v1468 = vadd.f32 %v124, %v1265
    %v1469 = vadd.f32 %v125, %v1323
    %v1470 = vadd.f32 %v126, %v1381
    %v1471 = vadd.f32 %v127, %v1439
    %v1472 = vadd.f32 %v128, %v1036
    %v1473 = vadd.f32 %v129, %v1094
    %v1474 = vadd.f32 %v130, %v1152
    %v1475 = vadd.f32 %v131, %v1210
    %v1476 = vadd.f32 %v132, %v1268
    %v1477 = vadd.f32 %v133, %v1326
    %v1478 = vadd.f32 %v134, %v1384
    %v1479 = vadd.f32 %v135, %v1442
    %v1480 = vadd.f32 %v136, %v1038
    %v1481 = vadd.f32 %v137, %v1096
    %v1482 = vadd.f32 %v138, %v1154
    %v1483 = vadd.f32 %v139, %v1212
    %v1484 = vadd.f32 %v140, %v1270
    %v1485 = vadd.f32 %v141, %v1328
    %v1486 = vadd.f32 %v142, %v1386
    %v1487 = vadd.f32 %v143, %v1444
    %v1488 = vadd.f32 %v144, %v1041
    %v1489 = vadd.f32 %v145, %v1099
    %v1490 = vadd.f32 %v146, %v1157
    %v1491 = vadd.f32 %v147, %v1215
    %v1492 = vadd.f32 %v148, %v1273
    %v1493 = vadd.f32 %v149, %v1331
    %v1494 = vadd.f32 %v150, %v1389
    %v1495 = vadd.f32 %v151, %v1447
    %v1496 = vadd.f32 %v152, %v1043
    %v1497 = vadd.f32 %v153, %v1101
    %v1498 = vadd.f32 %v154, %v1159
    %v1499 = vadd.f32 %v155, %v1217
    %v1500 = vadd.f32 %v156, %v1275
    %v1501 = vadd.f32 %v157, %v1333
    %v1502 = vadd.f32 %v158, %v1391
    %v1503 = vadd.f32 %v159, %v1449
    %v1504 = vadd.f32 %v160, %v1046
    %v1505 = vadd.f32 %v161, %v1104
    %v1506 = vadd.f32 %v162, %v1162
    %v1507 = vadd.f32 %v163, %v1220
    %v1508 = vadd.f32 %v164, %v1278
    %v1509 = vadd.f32 %v165, %v1336
    %v1510 = vadd.f32 %v166, %v1394
    %v1511 = vadd.f32 %v167, %v1452
    %v1512 = vadd.f32 %v168, %v1048
    %v1513 = vadd.f32 %v169, %v1106
    %v1514 = vadd.f32 %v170, %v1164
    %v1515 = vadd.f32 %v171, %v1222
    %v1516 = vadd.f32 %v172, %v1280
    %v1517 = vadd.f32 %v173, %v1338
    %v1518 = vadd.f32 %v174, %v1396
    %v1519 = vadd.f32 %v175, %v1454
    %1520 = vst [vmem:[#allocation2] sm:$0xff] %v1456
    %1521 = vst [vmem:[#allocation2 + $0x8] sm:$0xff] %v1457
    %1522 = vst [vmem:[#allocation2 + $0x10] sm:$0xff] %v1458
    %1523 = vst [vmem:[#allocation2 + $0x18] sm:$0xff] %v1459
    %1524 = vst [vmem:[#allocation2 + $0x20] sm:$0xff] %v1460
    %1525 = vst [vmem:[#allocation2 + $0x28] sm:$0xff] %v1461
    %1526 = vst [vmem:[#allocation2 + $0x30] sm:$0xff] %v1462
    %1527 = vst [vmem:[#allocation2 + $0x38] sm:$0xff] %v1463
    %1528 = vst [vmem:[#allocation2 + $0x40] sm:$0xff] %v1464
    %1529 = vst [vmem:[#allocation2 + $0x48] sm:$0xff] %v1465
    %1530 = vst [vmem:[#allocation2 + $0x50] sm:$0xff] %v1466
    %1531 = vst [vmem:[#allocation2 + $0x58] sm:$0xff] %v1467
    %1532 = vst [vmem:[#allocation2 + $0x60] sm:$0xff] %v1468
    %1533 = vst [vmem:[#allocation2 + $0x68] sm:$0xff] %v1469
    %1534 = vst [vmem:[#allocation2 + $0x70] sm:$0xff] %v1470
    %1535 = vst [vmem:[#allocation2 + $0x78] sm:$0xff] %v1471
    %1536 = vst [vmem:[#allocation2 + $0x80] sm:$0xff] %v1472
    %1537 = vst [vmem:[#allocation2 + $0x88] sm:$0xff] %v1473
    %1538 = vst [vmem:[#allocation2 + $0x90] sm:$0xff] %v1474
    %1539 = vst [vmem:[#allocation2 + $0x98] sm:$0xff] %v1475
    %1540 = vst [vmem:[#allocation2 + $0xa0] sm:$0xff] %v1476
    %1541 = vst [vmem:[#allocation2 + $0xa8] sm:$0xff] %v1477
    %1542 = vst [vmem:[#allocation2 + $0xb0] sm:$0xff] %v1478
    %1543 = vst [vmem:[#allocation2 + $0xb8] sm:$0xff] %v1479
    %1544 = vst [vmem:[#allocation2 + $0xc0] sm:$0xff] %v1480
    %1545 = vst [vmem:[#allocation2 + $0xc8] sm:$0xff] %v1481
    %1546 = vst [vmem:[#allocation2 + $0xd0] sm:$0xff] %v1482
    %1547 = vst [vmem:[#allocation2 + $0xd8] sm:$0xff] %v1483
    %1548 = vst [vmem:[#allocation2 + $0xe0] sm:$0xff] %v1484
    %1549 = vst [vmem:[#allocation2 + $0xe8] sm:$0xff] %v1485
    %1550 = vst [vmem:[#allocation2 + $0xf0] sm:$0xff] %v1486
    %1551 = vst [vmem:[#allocation2 + $0xf8] sm:$0xff] %v1487
    %1552 = vst [vmem:[#allocation2 + $0x100] sm:$0xff] %v1488
    %1553 = vst [vmem:[#allocation2 + $0x108] sm:$0xff] %v1489
    %1554 = vst [vmem:[#allocation2 + $0x110] sm:$0xff] %v1490
    %1555 = vst [vmem:[#allocation2 + $0x118] sm:$0xff] %v1491
    %1556 = vst [vmem:[#allocation2 + $0x120] sm:$0xff] %v1492
    %1557 = vst [vmem:[#allocation2 + $0x128] sm:$0xff] %v1493
    %1558 = vst [vmem:[#allocation2 + $0x130] sm:$0xff] %v1494
    %1559 = vst [vmem:[#allocation2 + $0x138] sm:$0xff] %v1495
    %1560 = vst [vmem:[#allocation2 + $0x140] sm:$0xff] %v1496
    %1561 = vst [vmem:[#allocation2 + $0x148] sm:$0xff] %v1497
    %1562 = vst [vmem:[#allocation2 + $0x150] sm:$0xff] %v1498
    %1563 = vst [vmem:[#allocation2 + $0x158] sm:$0xff] %v1499
    %1564 = vst [vmem:[#allocation2 + $0x160] sm:$0xff] %v1500
    %1565 = vst [vmem:[#allocation2 + $0x168] sm:$0xff] %v1501
    %1566 = vst [vmem:[#allocation2 + $0x170] sm:$0xff] %v1502
    %1567 = vst [vmem:[#allocation2 + $0x178] sm:$0xff] %v1503
    %1568 = vst [vmem:[#allocation2 + $0x180] sm:$0xff] %v1504
    %1569 = vst [vmem:[#allocation2 + $0x188] sm:$0xff] %v1505
    %1570 = vst [vmem:[#allocation2 + $0x190] sm:$0xff] %v1506
    %1571 = vst [vmem:[#allocation2 + $0x198] sm:$0xff] %v1507
    %1572 = vst [vmem:[#allocation2 + $0x1a0] sm:$0xff] %v1508
    %1573 = vst [vmem:[#allocation2 + $0x1a8] sm:$0xff] %v1509
    %1574 = vst [vmem:[#allocation2 + $0x1b0] sm:$0xff] %v1510
    %1575 = vst [vmem:[#allocation2 + $0x1b8] sm:$0xff] %v1511
    %1576 = vst [vmem:[#allocation2 + $0x1c0] sm:$0xff] %v1512
    %1577 = vst [vmem:[#allocation2 + $0x1c8] sm:$0xff] %v1513
    %1578 = vst [vmem:[#allocation2 + $0x1d0] sm:$0xff] %v1514
    %1579 = vst [vmem:[#allocation2 + $0x1d8] sm:$0xff] %v1515
    %1580 = vst [vmem:[#allocation2 + $0x1e0] sm:$0xff] %v1516
    %1581 = vst [vmem:[#allocation2 + $0x1e8] sm:$0xff] %v1517
    %1582 = vst [vmem:[#allocation2 + $0x1f0] sm:$0xff] %v1518
    %1583 = vst [vmem:[#allocation2 + $0x1f8] sm:$0xff] %v1519
    // Predicated region
    $region22: #{tpu_custom_call.1} parent=1 // pred_check
      %p1584 = pneg %p44
    $region23: #{tpu_custom_call.1} parent=1 // pred_check_branch
      %1586 = sbr.rel (%p1584) target = $region25
    $region24: #{tpu_custom_call.1} parent=1 // pred_region
      %v1587 = vld [vmem:[#allocation2] sm:$0xff]
      %v1588 = vld [vmem:[#allocation2 + $0x8] sm:$0xff]
      %v1589 = vld [vmem:[#allocation2 + $0x10] sm:$0xff]
      %v1590 = vld [vmem:[#allocation2 + $0x18] sm:$0xff]
      %v1591 = vld [vmem:[#allocation2 + $0x20] sm:$0xff]
      %v1592 = vld [vmem:[#allocation2 + $0x28] sm:$0xff]
      %v1593 = vld [vmem:[#allocation2 + $0x30] sm:$0xff]
      %v1594 = vld [vmem:[#allocation2 + $0x38] sm:$0xff]
      %v1595 = vld [vmem:[#allocation2 + $0x40] sm:$0xff]
      %v1596 = vld [vmem:[#allocation2 + $0x48] sm:$0xff]
      %v1597 = vld [vmem:[#allocation2 + $0x50] sm:$0xff]
      %v1598 = vld [vmem:[#allocation2 + $0x58] sm:$0xff]
      %v1599 = vld [vmem:[#allocation2 + $0x60] sm:$0xff]
      %v1600 = vld [vmem:[#allocation2 + $0x68] sm:$0xff]
      %v1601 = vld [vmem:[#allocation2 + $0x70] sm:$0xff]
      %v1602 = vld [vmem:[#allocation2 + $0x78] sm:$0xff]
      %v1603 = vld [vmem:[#allocation2 + $0x80] sm:$0xff]
      %v1604 = vld [vmem:[#allocation2 + $0x88] sm:$0xff]
      %v1605 = vld [vmem:[#allocation2 + $0x90] sm:$0xff]
      %v1606 = vld [vmem:[#allocation2 + $0x98] sm:$0xff]
      %v1607 = vld [vmem:[#allocation2 + $0xa0] sm:$0xff]
      %v1608 = vld [vmem:[#allocation2 + $0xa8] sm:$0xff]
      %v1609 = vld [vmem:[#allocation2 + $0xb0] sm:$0xff]
      %v1610 = vld [vmem:[#allocation2 + $0xb8] sm:$0xff]
      %v1611 = vld [vmem:[#allocation2 + $0xc0] sm:$0xff]
      %v1612 = vld [vmem:[#allocation2 + $0xc8] sm:$0xff]
      %v1613 = vld [vmem:[#allocation2 + $0xd0] sm:$0xff]
      %v1614 = vld [vmem:[#allocation2 + $0xd8] sm:$0xff]
      %v1615 = vld [vmem:[#allocation2 + $0xe0] sm:$0xff]
      %v1616 = vld [vmem:[#allocation2 + $0xe8] sm:$0xff]
      %v1617 = vld [vmem:[#allocation2 + $0xf0] sm:$0xff]
      %v1618 = vld [vmem:[#allocation2 + $0xf8] sm:$0xff]
      %v1619 = vld [vmem:[#allocation2 + $0x100] sm:$0xff]
      %v1620 = vld [vmem:[#allocation2 + $0x108] sm:$0xff]
      %v1621 = vld [vmem:[#allocation2 + $0x110] sm:$0xff]
      %v1622 = vld [vmem:[#allocation2 + $0x118] sm:$0xff]
      %v1623 = vld [vmem:[#allocation2 + $0x120] sm:$0xff]
      %v1624 = vld [vmem:[#allocation2 + $0x128] sm:$0xff]
      %v1625 = vld [vmem:[#allocation2 + $0x130] sm:$0xff]
      %v1626 = vld [vmem:[#allocation2 + $0x138] sm:$0xff]
      %v1627 = vld [vmem:[#allocation2 + $0x140] sm:$0xff]
      %v1628 = vld [vmem:[#allocation2 + $0x148] sm:$0xff]
      %v1629 = vld [vmem:[#allocation2 + $0x150] sm:$0xff]
      %v1630 = vld [vmem:[#allocation2 + $0x158] sm:$0xff]
      %v1631 = vld [vmem:[#allocation2 + $0x160] sm:$0xff]
      %v1632 = vld [vmem:[#allocation2 + $0x168] sm:$0xff]
      %v1633 = vld [vmem:[#allocation2 + $0x170] sm:$0xff]
      %v1634 = vld [vmem:[#allocation2 + $0x178] sm:$0xff]
      %v1635 = vld [vmem:[#allocation2 + $0x180] sm:$0xff]
      %v1636 = vld [vmem:[#allocation2 + $0x188] sm:$0xff]
      %v1637 = vld [vmem:[#allocation2 + $0x190] sm:$0xff]
      %v1638 = vld [vmem:[#allocation2 + $0x198] sm:$0xff]
      %v1639 = vld [vmem:[#allocation2 + $0x1a0] sm:$0xff]
      %v1640 = vld [vmem:[#allocation2 + $0x1a8] sm:$0xff]
      %v1641 = vld [vmem:[#allocation2 + $0x1b0] sm:$0xff]
      %v1642 = vld [vmem:[#allocation2 + $0x1b8] sm:$0xff]
      %v1643 = vld [vmem:[#allocation2 + $0x1c0] sm:$0xff]
      %v1644 = vld [vmem:[#allocation2 + $0x1c8] sm:$0xff]
      %v1645 = vld [vmem:[#allocation2 + $0x1d0] sm:$0xff]
      %v1646 = vld [vmem:[#allocation2 + $0x1d8] sm:$0xff]
      %v1647 = vld [vmem:[#allocation2 + $0x1e0] sm:$0xff]
      %v1648 = vld [vmem:[#allocation2 + $0x1e8] sm:$0xff]
      %v1649 = vld [vmem:[#allocation2 + $0x1f0] sm:$0xff]
      %v1650 = vld [vmem:[#allocation2 + $0x1f8] sm:$0xff]
      %v1651 = vpack.c.bf16 %v1588, %v1587
      %v1652 = vpack.c.bf16 %v1590, %v1589
      %v1653 = vpack.c.bf16 %v1592, %v1591
      %v1654 = vpack.c.bf16 %v1594, %v1593
      %v1655 = vpack.c.bf16 %v1596, %v1595
      %v1656 = vpack.c.bf16 %v1598, %v1597
      %v1657 = vpack.c.bf16 %v1600, %v1599
      %v1658 = vpack.c.bf16 %v1602, %v1601
      %v1659 = vpack.c.bf16 %v1604, %v1603
      %v1660 = vpack.c.bf16 %v1606, %v1605
      %v1661 = vpack.c.bf16 %v1608, %v1607
      %v1662 = vpack.c.bf16 %v1610, %v1609
      %v1663 = vpack.c.bf16 %v1612, %v1611
      %v1664 = vpack.c.bf16 %v1614, %v1613
      %v1665 = vpack.c.bf16 %v1616, %v1615
      %v1666 = vpack.c.bf16 %v1618, %v1617
      %v1667 = vpack.c.bf16 %v1620, %v1619
      %v1668 = vpack.c.bf16 %v1622, %v1621
      %v1669 = vpack.c.bf16 %v1624, %v1623
      %v1670 = vpack.c.bf16 %v1626, %v1625
      %v1671 = vpack.c.bf16 %v1628, %v1627
      %v1672 = vpack.c.bf16 %v1630, %v1629
      %v1673 = vpack.c.bf16 %v1632, %v1631
      %v1674 = vpack.c.bf16 %v1634, %v1633
      %v1675 = vpack.c.bf16 %v1636, %v1635
      %v1676 = vpack.c.bf16 %v1638, %v1637
      %v1677 = vpack.c.bf16 %v1640, %v1639
      %v1678 = vpack.c.bf16 %v1642, %v1641
      %v1679 = vpack.c.bf16 %v1644, %v1643
      %v1680 = vpack.c.bf16 %v1646, %v1645
      %v1681 = vpack.c.bf16 %v1648, %v1647
      %v1682 = vpack.c.bf16 %v1650, %v1649
      %1683 = vst [vmem:[#allocation8] sm:$0xff] %v1651
      %1684 = vst [vmem:[#allocation8 + $0x8] sm:$0xff] %v1652
      %1685 = vst [vmem:[#allocation8 + $0x10] sm:$0xff] %v1653
      %1686 = vst [vmem:[#allocation8 + $0x18] sm:$0xff] %v1654
      %1687 = vst [vmem:[#allocation8 + $0x20] sm:$0xff] %v1655
      %1688 = vst [vmem:[#allocation8 + $0x28] sm:$0xff] %v1656
      %1689 = vst [vmem:[#allocation8 + $0x30] sm:$0xff] %v1657
      %1690 = vst [vmem:[#allocation8 + $0x38] sm:$0xff] %v1658
      %1691 = vst [vmem:[#allocation8 + $0x40] sm:$0xff] %v1659
      %1692 = vst [vmem:[#allocation8 + $0x48] sm:$0xff] %v1660
      %1693 = vst [vmem:[#allocation8 + $0x50] sm:$0xff] %v1661
      %1694 = vst [vmem:[#allocation8 + $0x58] sm:$0xff] %v1662
      %1695 = vst [vmem:[#allocation8 + $0x60] sm:$0xff] %v1663
      %1696 = vst [vmem:[#allocation8 + $0x68] sm:$0xff] %v1664
      %1697 = vst [vmem:[#allocation8 + $0x70] sm:$0xff] %v1665
      %1698 = vst [vmem:[#allocation8 + $0x78] sm:$0xff] %v1666
      %1699 = vst [vmem:[#allocation8 + $0x80] sm:$0xff] %v1667
      %1700 = vst [vmem:[#allocation8 + $0x88] sm:$0xff] %v1668
      %1701 = vst [vmem:[#allocation8 + $0x90] sm:$0xff] %v1669
      %1702 = vst [vmem:[#allocation8 + $0x98] sm:$0xff] %v1670
      %1703 = vst [vmem:[#allocation8 + $0xa0] sm:$0xff] %v1671
      %1704 = vst [vmem:[#allocation8 + $0xa8] sm:$0xff] %v1672
      %1705 = vst [vmem:[#allocation8 + $0xb0] sm:$0xff] %v1673
      %1706 = vst [vmem:[#allocation8 + $0xb8] sm:$0xff] %v1674
      %1707 = vst [vmem:[#allocation8 + $0xc0] sm:$0xff] %v1675
      %1708 = vst [vmem:[#allocation8 + $0xc8] sm:$0xff] %v1676
      %1709 = vst [vmem:[#allocation8 + $0xd0] sm:$0xff] %v1677
      %1710 = vst [vmem:[#allocation8 + $0xd8] sm:$0xff] %v1678
      %1711 = vst [vmem:[#allocation8 + $0xe0] sm:$0xff] %v1679
      %1712 = vst [vmem:[#allocation8 + $0xe8] sm:$0xff] %v1680
      %1713 = vst [vmem:[#allocation8 + $0xf0] sm:$0xff] %v1681
      %1714 = vst [vmem:[#allocation8 + $0xf8] sm:$0xff] %v1682
    $region25: #{tpu_custom_call.1} parent=1 // pred_fallthru
      _
    // Predicated region
    $region26: #{tpu_custom_call.1} parent=1 // pred_check
      _
    $region27: #{tpu_custom_call.1} parent=1 // pred_check_branch
      %1716 = sbr.rel (0) target = $region29
    $region28: #{tpu_custom_call.1} parent=1 // pred_region
      %1718 = vsyncadd [#allocation5], 0
      %s1719 = sshll.u32 [#allocation8], 4
      %s1720 = int_to_ptr.vmem [resolvable:$true] %s1719
      %s1721 = sshll.u32 %s2, 4
      %s1722 = int_to_ptr.hbm [resolvable:$true] %s1721
      %1727 = dma.vmem_to_hbm [thread:$0]  %s1720, 4096, %s1722, [#allocation5], 512, 512, 32
    $region29: #{tpu_custom_call.1} parent=1 // pred_fallthru
      _
    // Predicated region
    $region30: #{tpu_custom_call.1} parent=1 // pred_check
      _
    $region31: #{tpu_custom_call.1} parent=1 // pred_check_branch
      %1729 = sbr.rel (0) target = $region33
    $region32: #{tpu_custom_call.1} parent=1 // pred_region
      %1731 = dma.done [#allocation5], 4096
    $region33: #{tpu_custom_call.1} parent=1 // pred_fallthru
      _
    %1732 = vsyncpa [#allocation4], 1
    %1733 = vsyncpa [#allocation7], 1
    %1734 = vsyncpa [#allocation5], 1

</llo_original>
